<compile_context>
chip_gen: v6e
topology: v6e:2x2x1
jax: 0.10.0
libtpu: 0.0.40
codegen_flags: <defaults>
</compile_context>

<pallas_src>
import functools
import math

import jax
import jax.numpy as jnp
from jax.experimental import pallas as pl
from jax.experimental.pallas import tpu as pltpu


def _round_up(x, m):
    return (x + m - 1) // m * m


# ---------------------------------------------------------------------------
# Pallas kernels
# ---------------------------------------------------------------------------
def _mm_stats_kernel(a_ref, b_ref, y_ref, ps_ref):
    """One (phase, M-tile) step: bf16 matmul, f32 accum, + per-tile BN partials."""
    a = a_ref[0].astype(jnp.bfloat16)                       # (TM, K)
    b = b_ref[0].astype(jnp.bfloat16)                       # (K, Cp)
    y = jnp.dot(a, b, preferred_element_type=jnp.float32)   # (TM, Cp) f32
    y_ref[0] = y
    s = jnp.sum(y, axis=0, keepdims=True)                   # (1, Cp)
    ss = jnp.sum(y * y, axis=0, keepdims=True)               # (1, Cp)
    ps_ref[0, 0] = jnp.concatenate([s, ss], axis=0)           # (2, Cp)


def _bn_lrelu_kernel(y_ref, scale_ref, shift_ref, o_ref):
    """Apply fused BatchNorm affine + LeakyReLU(0.2) to one tile (f32 math)."""
    t = y_ref[0] * scale_ref[...] + shift_ref[...]
    o_ref[0] = jnp.where(t > 0, t, 0.2 * t)


def _mm_tanh_kernel(a_ref, b_ref, o_ref):
    a = a_ref[0].astype(jnp.bfloat16)
    b = b_ref[0].astype(jnp.bfloat16)
    y = jnp.dot(a, b, preferred_element_type=jnp.float32)
    o_ref[0] = jnp.tanh(y)


# ---------------------------------------------------------------------------
# Pallas wrappers (grouped matmuls tiled over (phase, M))
# ---------------------------------------------------------------------------
_PAR2 = pltpu.CompilerParams(dimension_semantics=("parallel", "parallel"))


def _pad_group_inputs(A, B):
    G, M, K = A.shape
    Cout = B.shape[2]
    Cp = _round_up(Cout, 128)                  # lane-dense output
    TM = min(256, _round_up(M, 8))             # M tile (sublane aligned)
    Mp = _round_up(M, TM)
    Ap = jnp.pad(A, ((0, 0), (0, Mp - M), (0, 0)))
    Bp = jnp.pad(B, ((0, 0), (0, 0), (0, Cp - Cout)))
    return Ap, Bp, TM, Mp, Cp


def _fused_grouped_mm_bn_lrelu(A, B, gamma, beta, eps=1e-5):
    """A: (G, M, K), B: (G, K, Cout), gamma/beta: (Cout,) -> (G, M, Cout)."""
    G, M, K = A.shape
    Cout = B.shape[2]
    Ap, Bp, TM, Mp, Cp = _pad_group_inputs(A, B)
    Mt = Mp // TM

    # Pass 1: tiled matmul + per-tile BN partial sums.
    y, ps = pl.pallas_call(
        _mm_stats_kernel,
        out_shape=(jax.ShapeDtypeStruct((G, Mp, Cp), jnp.float32),
                   jax.ShapeDtypeStruct((G, Mt, 2, Cp), jnp.float32)),
        grid=(G, Mt),
        in_specs=[pl.BlockSpec((1, TM, K), lambda g, m: (g, m, 0)),
                  pl.BlockSpec((1, K, Cp), lambda g, m: (g, 0, 0))],
        out_specs=(pl.BlockSpec((1, TM, Cp), lambda g, m: (g, m, 0)),
                   pl.BlockSpec((1, 1, 2, Cp), lambda g, m: (g, m, 0, 0))),
        compiler_params=_PAR2,
    )(Ap, Bp)

    # Tiny JAX reduction: per-channel mean/var over the TRUE element count
    # (padded rows are all-zero, so they contribute nothing to either sum).
    count = jnp.float32(G * M)
    sums = jnp.sum(ps, axis=(0, 1))                       # (2, Cp)
    mean = sums[0] / count
    var = jnp.maximum(sums[1] / count - mean * mean, 0.0)  # biased, like torch BN
    gp = jnp.pad(gamma, (0, Cp - Cout), constant_values=1.0)
    bp = jnp.pad(beta, (0, Cp - Cout))
    scale_v = gp * jax.lax.rsqrt(var + eps)
    shift_v = bp - mean * scale_v
    scale = scale_v.reshape(1, Cp)
    shift = shift_v.reshape(1, Cp)

    # Pass 2: fused BN affine + LeakyReLU, tiled over the same grid.
    out = pl.pallas_call(
        _bn_lrelu_kernel,
        out_shape=jax.ShapeDtypeStruct((G, Mp, Cp), jnp.float32),
        grid=(G, Mt),
        in_specs=[pl.BlockSpec((1, TM, Cp), lambda g, m: (g, m, 0)),
                  pl.BlockSpec((1, Cp), lambda g, m: (0, 0)),
                  pl.BlockSpec((1, Cp), lambda g, m: (0, 0))],
        out_specs=pl.BlockSpec((1, TM, Cp), lambda g, m: (g, m, 0)),
        compiler_params=_PAR2,
    )(y, scale, shift)

    return out[:, :M, :Cout]


def _fused_grouped_mm_tanh(A, B):
    """A: (G, M, K), B: (G, K, Cout) -> tanh(A @ B): (G, M, Cout)."""
    G, M, K = A.shape
    Cout = B.shape[2]
    Ap, Bp, TM, Mp, Cp = _pad_group_inputs(A, B)
    Mt = Mp // TM

    out = pl.pallas_call(
        _mm_tanh_kernel,
        out_shape=jax.ShapeDtypeStruct((G, Mp, Cp), jnp.float32),
        grid=(G, Mt),
        in_specs=[pl.BlockSpec((1, TM, K), lambda g, m: (g, m, 0)),
                  pl.BlockSpec((1, K, Cp), lambda g, m: (g, 0, 0))],
        out_specs=pl.BlockSpec((1, TM, Cp), lambda g, m: (g, m, 0)),
        compiler_params=_PAR2,
    )(Ap, Bp)

    return out[:, :M, :Cout]


# ---------------------------------------------------------------------------
# ConvTranspose2d glue (NHWC, no zero-insertion, no 16x im2col)
# ---------------------------------------------------------------------------
# Sub-pixel taps for ConvTranspose2d(k=4, stride=2, pad=1):
# output parity 0 uses kernel rows {1, 3} at input shifts {0, -1};
# output parity 1 uses kernel rows {0, 2} at input shifts {+1, 0}.
_TAPS = (((1, 0), (3, -1)), ((0, 1), (2, 0)))


def _phase_decompose_s2(x_nhwc, w):
    """ConvT(k=4, s=2, p=1) as 4 parity-phase matmuls.

    x_nhwc: (N, H, W, Cin); w: (Cin, Cout, 4, 4) (PyTorch layout).
    Returns A: (4, N*H*W, 4*Cin), B: (4, 4*Cin, Cout); phase index = py*2+px.
    """
    N, H, W, Cin = x_nhwc.shape
    Cout = w.shape[1]
    xp = jnp.pad(x_nhwc, ((0, 0), (1, 1), (1, 1), (0, 0)))
    a_phases, b_phases = [], []
    for py in (0, 1):
        for px in (0, 1):
            slabs, taps = [], []
            for (kh, di) in _TAPS[py]:
                for (kw, dj) in _TAPS[px]:
                    slabs.append(xp[:, 1 + di:1 + di + H, 1 + dj:1 + dj + W, :])
                    taps.append(w[:, :, kh, kw])                  # (Cin, Cout)
            a_phases.append(
                jnp.concatenate(slabs, axis=-1).reshape(N * H * W, 4 * Cin))
            b_phases.append(jnp.concatenate(taps, axis=0))        # (4*Cin, Cout)
    return jnp.stack(a_phases), jnp.stack(b_phases)


def _interleave_phases(y, N, H, W, Cout):
    """y: (4, N*H*W, Cout) with phases py*2+px -> NHWC (N, 2H, 2W, Cout)."""
    y = y.reshape(2, 2, N, H, W, Cout)
    y = jnp.transpose(y, (2, 3, 0, 4, 1, 5))
    return y.reshape(N, 2 * H, 2 * W, Cout)


def _convt_layer0(x_flat, w, gamma, beta):
    """ConvTranspose2d(Cin, Cout, 4, 1, 0) on a 1x1 input + BN + LeakyReLU."""
    N, Cin = x_flat.shape
    Cout = w.shape[1]
    A = jnp.broadcast_to(x_flat[None], (16, N, Cin))              # one group/pixel
    B = jnp.transpose(w, (2, 3, 0, 1)).reshape(16, Cin, Cout)      # g = kh*4+kw
    y = _fused_grouped_mm_bn_lrelu(A, B, gamma, beta)              # (16, N, Cout)
    return jnp.transpose(y.reshape(4, 4, N, Cout), (2, 0, 1, 3))   # (N, 4, 4, Cout)


def _convt_s2_layer(x_nhwc, w, gamma=None, beta=None, final=False):
    """ConvTranspose2d(Cin, Cout, 4, 2, 1) + (BN+LeakyReLU | Tanh), NHWC in/out."""
    N, H, W, _ = x_nhwc.shape
    Cout = w.shape[1]
    A, B = _phase_decompose_s2(x_nhwc, w)
    if final:
        y = _fused_grouped_mm_tanh(A, B)
    else:
        y = _fused_grouped_mm_bn_lrelu(A, B, gamma, beta)
    return _interleave_phases(y, N, H, W, Cout)


# ---------------------------------------------------------------------------
# GeneratorNet parameters + forward
# ---------------------------------------------------------------------------
def init_params(key, input_nfilters, generator_nfilters, image_size, n_colors):
    init_mult = image_size // 8
    n_up = int(math.log2(image_size // 8))
    keys = jax.random.split(key, n_up + 2)

    hidden = []
    c_in, c_out = input_nfilters, generator_nfilters * init_mult
    w = 0.05 * jax.random.normal(keys[0], (c_in, c_out, 4, 4), jnp.float32)
    hidden.append((w, jnp.ones((c_out,), jnp.float32),
                   jnp.zeros((c_out,), jnp.float32)))
    for i in range(n_up):
        c_in, c_out = c_out, c_out // 2
        w = 0.05 * jax.random.normal(keys[i + 1], (c_in, c_out, 4, 4), jnp.float32)
        hidden.append((w, jnp.ones((c_out,), jnp.float32),
                       jnp.zeros((c_out,), jnp.float32)))
    final_w = 0.05 * jax.random.normal(keys[-1], (c_out, n_colors, 4, 4), jnp.float32)
    return hidden, final_w


def generator_forward(params, z):
    hidden, final_w = params
    N = z.shape[0]
    # Layer 0: ConvT(nz, C0, 4, 1, 0) on the (N, nz, 1, 1) latent.
    w0, g0, b0 = hidden[0]
    x = _convt_layer0(z.reshape(N, -1), w0, g0, b0)        # NHWC (N, 4, 4, C0)
    # Upsampling stack: ConvT(C, C/2, 4, 2, 1) + BN + LeakyReLU.
    for (w, g, b) in hidden[1:]:
        x = _convt_s2_layer(x, w, g, b)
    # Final: ConvT(C, n_colors, 4, 2, 1) + Tanh.
    x = _convt_s2_layer(x, final_w, final=True)
    return jnp.transpose(x, (0, 3, 1, 2))                   # NCHW at the boundary


# ---------------------------------------------------------------------------
if __name__ == "__main__":
    key = jax.random.PRNGKey(0)
    k_params, k_z = jax.random.split(key)

    # Small config: GeneratorNet(input_nfilters=4, generator_nfilters=8,
    #                            image_size=16, n_colors=3), batch=2.
    input_nfilters, generator_nfilters, image_size, n_colors = 4, 8, 16, 3
    batch = 2

    params = init_params(k_params, input_nfilters, generator_nfilters,
                         image_size, n_colors)
    z = jax.random.normal(k_z, (batch, input_nfilters, 1, 1), jnp.float32)

    fwd = jax.jit(functools.partial(generator_forward, params))
    out = jax.block_until_ready(fwd(z))

    assert out.shape == (batch, n_colors, image_size, image_size), out.shape
    assert out.dtype == jnp.float32
    assert bool(jnp.all(jnp.isfinite(out)))
    assert bool(jnp.all(jnp.abs(out) <= 1.0))   # tanh range
    print("KERNEL_OK")
</pallas_src>

<mosaic_0001>
module attributes {stable_mosaic.version = 11 : i64} {
  func.func @_mm_stats_kernel(%arg0: i32, %arg1: i32, %arg2: memref<1x8x4xf32, #tpu.memory_space<vmem>>, %arg3: memref<1x4x128xf32, #tpu.memory_space<vmem>>, %arg4: memref<1x8x128xf32, #tpu.memory_space<vmem>>, %arg5: memref<1x1x2x128xf32, #tpu.memory_space<vmem>>) attributes {dimension_semantics = [#tpu.dimension_semantics<parallel>, #tpu.dimension_semantics<parallel>], iteration_bounds = array<i64: 16, 1>, scalar_prefetch = 0 : i64, scratch_operands = 0 : i64, tpu.core_type = #tpu.core_type<tc>, window_params = [{transform_indices = @transform_0, window_bounds = array<i64: 1, 8, 4>}, {transform_indices = @transform_1, window_bounds = array<i64: 1, 4, 128>}, {transform_indices = @transform_2, window_bounds = array<i64: 1, 8, 128>}, {transform_indices = @transform_3, window_bounds = array<i64: 1, 1, 2, 128>}]} {
    %c0 = arith.constant 0 : index
    %c0_0 = arith.constant 0 : index
    %c0_1 = arith.constant 0 : index
    %0 = vector.load %arg2[%c0, %c0_0, %c0_1] : memref<1x8x4xf32, #tpu.memory_space<vmem>>, vector<1x8x4xf32>
    %1 = vector.shape_cast %0 : vector<1x8x4xf32> to vector<8x4xf32>
    %2 = arith.truncf %1 : vector<8x4xf32> to vector<8x4xbf16>
    %c0_2 = arith.constant 0 : index
    %c0_3 = arith.constant 0 : index
    %c0_4 = arith.constant 0 : index
    %3 = vector.load %arg3[%c0_2, %c0_3, %c0_4] : memref<1x4x128xf32, #tpu.memory_space<vmem>>, vector<1x4x128xf32>
    %4 = vector.shape_cast %3 : vector<1x4x128xf32> to vector<4x128xf32>
    %5 = arith.truncf %4 : vector<4x128xf32> to vector<4x128xbf16>
    %cst = arith.constant dense<0.000000e+00> : vector<8x128xf32>
    %6 = tpu.matmul %2, %5, %cst {dimension_numbers = #tpu.dot_dimension_numbers<[1], [0], [0], [1], [0, 0, 1, 1], [], []>} : vector<8x4xbf16>, vector<4x128xbf16>, vector<8x128xf32> -> vector<8x128xf32>
    %c0_5 = arith.constant 0 : index
    %c0_6 = arith.constant 0 : index
    %c0_7 = arith.constant 0 : index
    %7 = vector.load %arg4[%c0_5, %c0_6, %c0_7] : memref<1x8x128xf32, #tpu.memory_space<vmem>>, vector<1x8x128xf32>
    %8 = vector.shape_cast %7 : vector<1x8x128xf32> to vector<8x128xf32>
    %9 = vector.shape_cast %6 : vector<8x128xf32> to vector<1x8x128xf32>
    tpu.vector_store %arg4[%c0_5, %c0_6, %c0_7], %9 {strides = array<i32>} : memref<1x8x128xf32, #tpu.memory_space<vmem>>, vector<1x8x128xf32>,
    %cst_8 = arith.constant dense<0.000000e+00> : vector<128xf32>
    %10 = vector.multi_reduction <add>, %6, %cst_8 [0] : vector<8x128xf32> to vector<128xf32>
    %11 = vector.shape_cast %10 : vector<128xf32> to vector<1x128xf32>
    %12 = arith.mulf %6, %6 : vector<8x128xf32>
    %cst_9 = arith.constant dense<0.000000e+00> : vector<128xf32>
    %13 = vector.multi_reduction <add>, %12, %cst_9 [0] : vector<8x128xf32> to vector<128xf32>
    %14 = vector.shape_cast %13 : vector<128xf32> to vector<1x128xf32>
    %15 = tpu.concatenate %11, %14 in 0 : vector<1x128xf32>, vector<1x128xf32> -> vector<2x128xf32>
    %c0_10 = arith.constant 0 : index
    %c0_11 = arith.constant 0 : index
    %c0_12 = arith.constant 0 : index
    %c0_13 = arith.constant 0 : index
    %16 = vector.load %arg5[%c0_10, %c0_11, %c0_12, %c0_13] : memref<1x1x2x128xf32, #tpu.memory_space<vmem>>, vector<1x1x2x128xf32>
    %17 = vector.shape_cast %16 : vector<1x1x2x128xf32> to vector<2x128xf32>
    %18 = vector.shape_cast %15 : vector<2x128xf32> to vector<1x1x2x128xf32>
    tpu.vector_store %arg5[%c0_10, %c0_11, %c0_12, %c0_13], %18 {strides = array<i32>} : memref<1x1x2x128xf32, #tpu.memory_space<vmem>>, vector<1x1x2x128xf32>,
    return
  }
  func.func @transform_0(%arg0: i32, %arg1: i32) -> (i32, i32, i32) {
    %c0_i32 = arith.constant 0 : i32
    %c0_i32_0 = arith.constant 0 : i32
    return %arg0, %arg1, %c0_i32 : i32, i32, i32
  }
  func.func @transform_1(%arg0: i32, %arg1: i32) -> (i32, i32, i32) {
    %c0_i32 = arith.constant 0 : i32
    %c0_i32_0 = arith.constant 0 : i32
    %c0_i32_1 = arith.constant 0 : i32
    return %arg0, %c0_i32, %c0_i32_0 : i32, i32, i32
  }
  func.func @transform_2(%arg0: i32, %arg1: i32) -> (i32, i32, i32) {
    %c0_i32 = arith.constant 0 : i32
    %c0_i32_0 = arith.constant 0 : i32
    return %arg0, %arg1, %c0_i32 : i32, i32, i32
  }
  func.func @transform_3(%arg0: i32, %arg1: i32) -> (i32, i32, i32, i32) {
    %c0_i32 = arith.constant 0 : i32
    %c0_i32_0 = arith.constant 0 : i32
    %c0_i32_1 = arith.constant 0 : i32
    return %arg0, %arg1, %c0_i32, %c0_i32_0 : i32, i32, i32, i32
  }
}

module attributes {stable_mosaic.version = 11 : i64} {
  func.func @_bn_lrelu_kernel(%arg0: i32, %arg1: i32, %arg2: memref<1x8x128xf32, #tpu.memory_space<vmem>>, %arg3: memref<1x128xf32, #tpu.memory_space<vmem>>, %arg4: memref<1x128xf32, #tpu.memory_space<vmem>>, %arg5: memref<1x8x128xf32, #tpu.memory_space<vmem>>) attributes {dimension_semantics = [#tpu.dimension_semantics<parallel>, #tpu.dimension_semantics<parallel>], iteration_bounds = array<i64: 16, 1>, scalar_prefetch = 0 : i64, scratch_operands = 0 : i64, tpu.core_type = #tpu.core_type<tc>, window_params = [{transform_indices = @transform_0, window_bounds = array<i64: 1, 8, 128>}, {pipeline_mode = #tpu.pipeline_mode<synchronous>, transform_indices = @transform_1, window_bounds = array<i64: 1, 128>}, {pipeline_mode = #tpu.pipeline_mode<synchronous>, transform_indices = @transform_2, window_bounds = array<i64: 1, 128>}, {transform_indices = @transform_3, window_bounds = array<i64: 1, 8, 128>}]} {
    %c0 = arith.constant 0 : index
    %c0_0 = arith.constant 0 : index
    %c0_1 = arith.constant 0 : index
    %0 = vector.load %arg2[%c0, %c0_0, %c0_1] : memref<1x8x128xf32, #tpu.memory_space<vmem>>, vector<1x8x128xf32>
    %1 = vector.shape_cast %0 : vector<1x8x128xf32> to vector<8x128xf32>
    %c0_2 = arith.constant 0 : index
    %c0_3 = arith.constant 0 : index
    %2 = vector.load %arg3[%c0_2, %c0_3] : memref<1x128xf32, #tpu.memory_space<vmem>>, vector<1x128xf32>
    %3 = vector.broadcast %2 : vector<1x128xf32> to vector<8x128xf32>
    %4 = arith.mulf %1, %3 : vector<8x128xf32>
    %c0_4 = arith.constant 0 : index
    %c0_5 = arith.constant 0 : index
    %5 = vector.load %arg4[%c0_4, %c0_5] : memref<1x128xf32, #tpu.memory_space<vmem>>, vector<1x128xf32>
    %6 = vector.broadcast %5 : vector<1x128xf32> to vector<8x128xf32>
    %7 = arith.addf %4, %6 : vector<8x128xf32>
    %cst = arith.constant 0.000000e+00 : f32
    %8 = vector.broadcast %cst : f32 to vector<8x128xf32>
    %9 = arith.cmpf ogt, %7, %8 : vector<8x128xf32>
    %cst_6 = arith.constant 2.000000e-01 : f32
    %10 = vector.broadcast %cst_6 : f32 to vector<8x128xf32>
    %11 = arith.mulf %10, %7 : vector<8x128xf32>
    %12 = arith.select %9, %7, %11 : vector<8x128xi1>, vector<8x128xf32>
    %c0_7 = arith.constant 0 : index
    %c0_8 = arith.constant 0 : index
    %c0_9 = arith.constant 0 : index
    %13 = vector.load %arg5[%c0_7, %c0_8, %c0_9] : memref<1x8x128xf32, #tpu.memory_space<vmem>>, vector<1x8x128xf32>
    %14 = vector.shape_cast %13 : vector<1x8x128xf32> to vector<8x128xf32>
    %15 = vector.shape_cast %12 : vector<8x128xf32> to vector<1x8x128xf32>
    tpu.vector_store %arg5[%c0_7, %c0_8, %c0_9], %15 {strides = array<i32>} : memref<1x8x128xf32, #tpu.memory_space<vmem>>, vector<1x8x128xf32>,
    return
  }
  func.func @transform_0(%arg0: i32, %arg1: i32) -> (i32, i32, i32) {
    %c0_i32 = arith.constant 0 : i32
    %c0_i32_0 = arith.constant 0 : i32
    return %arg0, %arg1, %c0_i32 : i32, i32, i32
  }
  func.func @transform_1(%arg0: i32, %arg1: i32) -> (i32, i32) {
    %c0_i32 = arith.constant 0 : i32
    %c0_i32_0 = arith.constant 0 : i32
    %c0_i32_1 = arith.constant 0 : i32
    return %c0_i32, %c0_i32_0 : i32, i32
  }
  func.func @transform_2(%arg0: i32, %arg1: i32) -> (i32, i32) {
    %c0_i32 = arith.constant 0 : i32
    %c0_i32_0 = arith.constant 0 : i32
    %c0_i32_1 = arith.constant 0 : i32
    return %c0_i32, %c0_i32_0 : i32, i32
  }
  func.func @transform_3(%arg0: i32, %arg1: i32) -> (i32, i32, i32) {
    %c0_i32 = arith.constant 0 : i32
    %c0_i32_0 = arith.constant 0 : i32
    return %arg0, %arg1, %c0_i32 : i32, i32, i32
  }
}

module attributes {stable_mosaic.version = 11 : i64} {
  func.func @_mm_stats_kernel(%arg0: i32, %arg1: i32, %arg2: memref<1x32x64xf32, #tpu.memory_space<vmem>>, %arg3: memref<1x64x128xf32, #tpu.memory_space<vmem>>, %arg4: memref<1x32x128xf32, #tpu.memory_space<vmem>>, %arg5: memref<1x1x2x128xf32, #tpu.memory_space<vmem>>) attributes {dimension_semantics = [#tpu.dimension_semantics<parallel>, #tpu.dimension_semantics<parallel>], iteration_bounds = array<i64: 4, 1>, scalar_prefetch = 0 : i64, scratch_operands = 0 : i64, tpu.core_type = #tpu.core_type<tc>, window_params = [{transform_indices = @transform_0, window_bounds = array<i64: 1, 32, 64>}, {transform_indices = @transform_1, window_bounds = array<i64: 1, 64, 128>}, {transform_indices = @transform_2, window_bounds = array<i64: 1, 32, 128>}, {transform_indices = @transform_3, window_bounds = array<i64: 1, 1, 2, 128>}]} {
    %c0 = arith.constant 0 : index
    %c0_0 = arith.constant 0 : index
    %c0_1 = arith.constant 0 : index
    %0 = vector.load %arg2[%c0, %c0_0, %c0_1] : memref<1x32x64xf32, #tpu.memory_space<vmem>>, vector<1x32x64xf32>
    %1 = vector.shape_cast %0 : vector<1x32x64xf32> to vector<32x64xf32>
    %2 = arith.truncf %1 : vector<32x64xf32> to vector<32x64xbf16>
    %c0_2 = arith.constant 0 : index
    %c0_3 = arith.constant 0 : index
    %c0_4 = arith.constant 0 : index
    %3 = vector.load %arg3[%c0_2, %c0_3, %c0_4] : memref<1x64x128xf32, #tpu.memory_space<vmem>>, vector<1x64x128xf32>
    %4 = vector.shape_cast %3 : vector<1x64x128xf32> to vector<64x128xf32>
    %5 = arith.truncf %4 : vector<64x128xf32> to vector<64x128xbf16>
    %cst = arith.constant dense<0.000000e+00> : vector<32x128xf32>
    %6 = tpu.matmul %2, %5, %cst {dimension_numbers = #tpu.dot_dimension_numbers<[1], [0], [0], [1], [0, 0, 1, 1], [], []>} : vector<32x64xbf16>, vector<64x128xbf16>, vector<32x128xf32> -> vector<32x128xf32>
    %c0_5 = arith.constant 0 : index
    %c0_6 = arith.constant 0 : index
    %c0_7 = arith.constant 0 : index
    %7 = vector.load %arg4[%c0_5, %c0_6, %c0_7] : memref<1x32x128xf32, #tpu.memory_space<vmem>>, vector<1x32x128xf32>
    %8 = vector.shape_cast %7 : vector<1x32x128xf32> to vector<32x128xf32>
    %9 = vector.shape_cast %6 : vector<32x128xf32> to vector<1x32x128xf32>
    tpu.vector_store %arg4[%c0_5, %c0_6, %c0_7], %9 {strides = array<i32>} : memref<1x32x128xf32, #tpu.memory_space<vmem>>, vector<1x32x128xf32>,
    %cst_8 = arith.constant dense<0.000000e+00> : vector<128xf32>
    %10 = vector.multi_reduction <add>, %6, %cst_8 [0] : vector<32x128xf32> to vector<128xf32>
    %11 = vector.shape_cast %10 : vector<128xf32> to vector<1x128xf32>
    %12 = arith.mulf %6, %6 : vector<32x128xf32>
    %cst_9 = arith.constant dense<0.000000e+00> : vector<128xf32>
    %13 = vector.multi_reduction <add>, %12, %cst_9 [0] : vector<32x128xf32> to vector<128xf32>
    %14 = vector.shape_cast %13 : vector<128xf32> to vector<1x128xf32>
    %15 = tpu.concatenate %11, %14 in 0 : vector<1x128xf32>, vector<1x128xf32> -> vector<2x128xf32>
    %c0_10 = arith.constant 0 : index
    %c0_11 = arith.constant 0 : index
    %c0_12 = arith.constant 0 : index
    %c0_13 = arith.constant 0 : index
    %16 = vector.load %arg5[%c0_10, %c0_11, %c0_12, %c0_13] : memref<1x1x2x128xf32, #tpu.memory_space<vmem>>, vector<1x1x2x128xf32>
    %17 = vector.shape_cast %16 : vector<1x1x2x128xf32> to vector<2x128xf32>
    %18 = vector.shape_cast %15 : vector<2x128xf32> to vector<1x1x2x128xf32>
    tpu.vector_store %arg5[%c0_10, %c0_11, %c0_12, %c0_13], %18 {strides = array<i32>} : memref<1x1x2x128xf32, #tpu.memory_space<vmem>>, vector<1x1x2x128xf32>,
    return
  }
  func.func @transform_0(%arg0: i32, %arg1: i32) -> (i32, i32, i32) {
    %c0_i32 = arith.constant 0 : i32
    %c0_i32_0 = arith.constant 0 : i32
    return %arg0, %arg1, %c0_i32 : i32, i32, i32
  }
  func.func @transform_1(%arg0: i32, %arg1: i32) -> (i32, i32, i32) {
    %c0_i32 = arith.constant 0 : i32
    %c0_i32_0 = arith.constant 0 : i32
    %c0_i32_1 = arith.constant 0 : i32
    return %arg0, %c0_i32, %c0_i32_0 : i32, i32, i32
  }
  func.func @transform_2(%arg0: i32, %arg1: i32) -> (i32, i32, i32) {
    %c0_i32 = arith.constant 0 : i32
    %c0_i32_0 = arith.constant 0 : i32
    return %arg0, %arg1, %c0_i32 : i32, i32, i32
  }
  func.func @transform_3(%arg0: i32, %arg1: i32) -> (i32, i32, i32, i32) {
    %c0_i32 = arith.constant 0 : i32
    %c0_i32_0 = arith.constant 0 : i32
    %c0_i32_1 = arith.constant 0 : i32
    return %arg0, %arg1, %c0_i32, %c0_i32_0 : i32, i32, i32, i32
  }
}

module attributes {stable_mosaic.version = 11 : i64} {
  func.func @_bn_lrelu_kernel(%arg0: i32, %arg1: i32, %arg2: memref<1x32x128xf32, #tpu.memory_space<vmem>>, %arg3: memref<1x128xf32, #tpu.memory_space<vmem>>, %arg4: memref<1x128xf32, #tpu.memory_space<vmem>>, %arg5: memref<1x32x128xf32, #tpu.memory_space<vmem>>) attributes {dimension_semantics = [#tpu.dimension_semantics<parallel>, #tpu.dimension_semantics<parallel>], iteration_bounds = array<i64: 4, 1>, scalar_prefetch = 0 : i64, scratch_operands = 0 : i64, tpu.core_type = #tpu.core_type<tc>, window_params = [{transform_indices = @transform_0, window_bounds = array<i64: 1, 32, 128>}, {pipeline_mode = #tpu.pipeline_mode<synchronous>, transform_indices = @transform_1, window_bounds = array<i64: 1, 128>}, {pipeline_mode = #tpu.pipeline_mode<synchronous>, transform_indices = @transform_2, window_bounds = array<i64: 1, 128>}, {transform_indices = @transform_3, window_bounds = array<i64: 1, 32, 128>}]} {
    %c0 = arith.constant 0 : index
    %c0_0 = arith.constant 0 : index
    %c0_1 = arith.constant 0 : index
    %0 = vector.load %arg2[%c0, %c0_0, %c0_1] : memref<1x32x128xf32, #tpu.memory_space<vmem>>, vector<1x32x128xf32>
    %1 = vector.shape_cast %0 : vector<1x32x128xf32> to vector<32x128xf32>
    %c0_2 = arith.constant 0 : index
    %c0_3 = arith.constant 0 : index
    %2 = vector.load %arg3[%c0_2, %c0_3] : memref<1x128xf32, #tpu.memory_space<vmem>>, vector<1x128xf32>
    %3 = vector.broadcast %2 : vector<1x128xf32> to vector<32x128xf32>
    %4 = arith.mulf %1, %3 : vector<32x128xf32>
    %c0_4 = arith.constant 0 : index
    %c0_5 = arith.constant 0 : index
    %5 = vector.load %arg4[%c0_4, %c0_5] : memref<1x128xf32, #tpu.memory_space<vmem>>, vector<1x128xf32>
    %6 = vector.broadcast %5 : vector<1x128xf32> to vector<32x128xf32>
    %7 = arith.addf %4, %6 : vector<32x128xf32>
    %cst = arith.constant 0.000000e+00 : f32
    %8 = vector.broadcast %cst : f32 to vector<32x128xf32>
    %9 = arith.cmpf ogt, %7, %8 : vector<32x128xf32>
    %cst_6 = arith.constant 2.000000e-01 : f32
    %10 = vector.broadcast %cst_6 : f32 to vector<32x128xf32>
    %11 = arith.mulf %10, %7 : vector<32x128xf32>
    %12 = arith.select %9, %7, %11 : vector<32x128xi1>, vector<32x128xf32>
    %c0_7 = arith.constant 0 : index
    %c0_8 = arith.constant 0 : index
    %c0_9 = arith.constant 0 : index
    %13 = vector.load %arg5[%c0_7, %c0_8, %c0_9] : memref<1x32x128xf32, #tpu.memory_space<vmem>>, vector<1x32x128xf32>
    %14 = vector.shape_cast %13 : vector<1x32x128xf32> to vector<32x128xf32>
    %15 = vector.shape_cast %12 : vector<32x128xf32> to vector<1x32x128xf32>
    tpu.vector_store %arg5[%c0_7, %c0_8, %c0_9], %15 {strides = array<i32>} : memref<1x32x128xf32, #tpu.memory_space<vmem>>, vector<1x32x128xf32>,
    return
  }
  func.func @transform_0(%arg0: i32, %arg1: i32) -> (i32, i32, i32) {
    %c0_i32 = arith.constant 0 : i32
    %c0_i32_0 = arith.constant 0 : i32
    return %arg0, %arg1, %c0_i32 : i32, i32, i32
  }
  func.func @transform_1(%arg0: i32, %arg1: i32) -> (i32, i32) {
    %c0_i32 = arith.constant 0 : i32
    %c0_i32_0 = arith.constant 0 : i32
    %c0_i32_1 = arith.constant 0 : i32
    return %c0_i32, %c0_i32_0 : i32, i32
  }
  func.func @transform_2(%arg0: i32, %arg1: i32) -> (i32, i32) {
    %c0_i32 = arith.constant 0 : i32
    %c0_i32_0 = arith.constant 0 : i32
    %c0_i32_1 = arith.constant 0 : i32
    return %c0_i32, %c0_i32_0 : i32, i32
  }
  func.func @transform_3(%arg0: i32, %arg1: i32) -> (i32, i32, i32) {
    %c0_i32 = arith.constant 0 : i32
    %c0_i32_0 = arith.constant 0 : i32
    return %arg0, %arg1, %c0_i32 : i32, i32, i32
  }
}

module attributes {stable_mosaic.version = 11 : i64} {
  func.func @_mm_tanh_kernel(%arg0: i32, %arg1: i32, %arg2: memref<1x128x32xf32, #tpu.memory_space<vmem>>, %arg3: memref<1x32x128xf32, #tpu.memory_space<vmem>>, %arg4: memref<1x128x128xf32, #tpu.memory_space<vmem>>) attributes {dimension_semantics = [#tpu.dimension_semantics<parallel>, #tpu.dimension_semantics<parallel>], iteration_bounds = array<i64: 4, 1>, scalar_prefetch = 0 : i64, scratch_operands = 0 : i64, tpu.core_type = #tpu.core_type<tc>, window_params = [{transform_indices = @transform_0, window_bounds = array<i64: 1, 128, 32>}, {transform_indices = @transform_1, window_bounds = array<i64: 1, 32, 128>}, {transform_indices = @transform_2, window_bounds = array<i64: 1, 128, 128>}]} {
    %c0 = arith.constant 0 : index
    %c0_0 = arith.constant 0 : index
    %c0_1 = arith.constant 0 : index
    %0 = vector.load %arg2[%c0, %c0_0, %c0_1] : memref<1x128x32xf32, #tpu.memory_space<vmem>>, vector<1x128x32xf32>
    %1 = vector.shape_cast %0 : vector<1x128x32xf32> to vector<128x32xf32>
    %2 = arith.truncf %1 : vector<128x32xf32> to vector<128x32xbf16>
    %c0_2 = arith.constant 0 : index
    %c0_3 = arith.constant 0 : index
    %c0_4 = arith.constant 0 : index
    %3 = vector.load %arg3[%c0_2, %c0_3, %c0_4] : memref<1x32x128xf32, #tpu.memory_space<vmem>>, vector<1x32x128xf32>
    %4 = vector.shape_cast %3 : vector<1x32x128xf32> to vector<32x128xf32>
    %5 = arith.truncf %4 : vector<32x128xf32> to vector<32x128xbf16>
    %cst = arith.constant dense<0.000000e+00> : vector<128x128xf32>
    %6 = tpu.matmul %2, %5, %cst {dimension_numbers = #tpu.dot_dimension_numbers<[1], [0], [0], [1], [0, 0, 1, 1], [], []>} : vector<128x32xbf16>, vector<32x128xbf16>, vector<128x128xf32> -> vector<128x128xf32>
    %7 = math.tanh %6 : vector<128x128xf32>
    %c0_5 = arith.constant 0 : index
    %c0_6 = arith.constant 0 : index
    %c0_7 = arith.constant 0 : index
    %8 = vector.load %arg4[%c0_5, %c0_6, %c0_7] : memref<1x128x128xf32, #tpu.memory_space<vmem>>, vector<1x128x128xf32>
    %9 = vector.shape_cast %8 : vector<1x128x128xf32> to vector<128x128xf32>
    %10 = vector.shape_cast %7 : vector<128x128xf32> to vector<1x128x128xf32>
    tpu.vector_store %arg4[%c0_5, %c0_6, %c0_7], %10 {strides = array<i32>} : memref<1x128x128xf32, #tpu.memory_space<vmem>>, vector<1x128x128xf32>,
    return
  }
  func.func @transform_0(%arg0: i32, %arg1: i32) -> (i32, i32, i32) {
    %c0_i32 = arith.constant 0 : i32
    %c0_i32_0 = arith.constant 0 : i32
    return %arg0, %arg1, %c0_i32 : i32, i32, i32
  }
  func.func @transform_1(%arg0: i32, %arg1: i32) -> (i32, i32, i32) {
    %c0_i32 = arith.constant 0 : i32
    %c0_i32_0 = arith.constant 0 : i32
    %c0_i32_1 = arith.constant 0 : i32
    return %arg0, %c0_i32, %c0_i32_0 : i32, i32, i32
  }
  func.func @transform_2(%arg0: i32, %arg1: i32) -> (i32, i32, i32) {
    %c0_i32 = arith.constant 0 : i32
    %c0_i32_0 = arith.constant 0 : i32
    return %arg0, %arg1, %c0_i32 : i32, i32, i32
  }
}

</mosaic_0001>

<llo_original>
// kernel: generator_forward.6
$region0: #{generator_forward.6}
  #allocation0 [shape = 'u32[]', space=smem, size = 0x4, offset = 0x4, fixed_abs, tag = 'smem constant byte address 0x4 - core index']
  #allocation1 [shape = 'u32[144,128]{1,0:T(1,128)}', space=vmem, size = 0x12000, scoped, tag = 'internal scratch']
  %s0 = inlined_call_operand.vmem [shape: f32[16,8,128], index: 0, kind: input, shape index: {}]
  %s1 = inlined_call_operand.vmem [shape: f32[1,128], index: 1, kind: input, shape index: {}]
  %s2 = inlined_call_operand.vmem [shape: f32[1,128], index: 2, kind: input, shape index: {}]
  %s3 = inlined_call_operand.vmem [shape: f32[16,8,128], index: 3, kind: output, shape index: {}]
  %s4 = sld [smem:[#allocation0]]
  $region45: #{generator_forward.6} parent=0
    _
  %s6 = ssub.s32 1, %s4
  %s7 = scalar_select 0, %s6, %s4
  loop: start=0, step=1, limit=18
  $region2: #{generator_forward.6} parent=0 // loop_pre_header
    _
  $region3: #{generator_forward.6} parent=0 // loop_header
    %s9 = sphi 0, %s13
    %p10 = scmp.ge.s32.totalorder %s9, 18
    %s16 = sphi 0, %s28
    %s17 = sphi 0, %s24
    %s18 = sphi 0, %s16
    %s19 = sphi 0, %s17
    %s20 = sphi 0, %s18
    %s21 = sphi 0, %s19
    %s33 = sphi 0, %s35
    %s36 = sphi 0, %s33
    %s37 = sphi 0, %s36
    %s53 = sphi 0, %s37
    %s57 = sphi 0, %s57
    %s59 = sphi 0, %s57
    %s60 = sphi 0, %s59
    %s74 = sphi 0, %s60
    %s78 = sphi 0, %s78
    %s80 = sphi 0, %s78
    %s81 = sphi 0, %s80
    %s95 = sphi 0, %s81
    %s103 = sphi 0, %s105
    %s106 = sphi 0, %s103
    %s107 = sphi 0, %s106
    %s123 = sphi 0, %s107
  $region4: #{generator_forward.6} parent=0 // loop_header_branch
    %12 = sbr.rel (%p10) target = $region8
  $region5: #{generator_forward.6} parent=0 // loop_body
    %s14 = ssub.s32 %s9, 1
    %s15 = ssub.s32 %s9, 2
    %s22 = sadd.s32 1, %s17
    %p23 = scmp.ge.s32.totalorder %s22, 1
    %s24 = scalar_select %p23, 0, %s22
    %s25 = sadd.s32 1, %s16
    %s26 = scalar_select %p23, %s25, %s16
    %p27 = scmp.ge.s32.totalorder %s26, 16
    %s28 = scalar_select %p27, 0, %s26
    %s29 = ssub.s32 %s16, %s28
    %s30 = ssub.s32 %s17, %s24
    %s31 = sor.u32 %s29, %s30
    %p32 = scmp.eq.s32.totalorder %s31, 0
    %s34 = sadd.s32 %s33, 1
    %s35 = scalar_select %p32, %s33, %s34
    %p38 = pneg %p32
    %p39 = scmp.eq.s32.totalorder %s9, 15
    %p40 = por %p38, %p39
    %p41 = scmp.ne.s32.totalorder %s33, %s36
    %p42 = scmp.eq.s32.totalorder %s9, 0
    %p43 = por %p41, %p42
    %p44 = scmp.ne.s32.totalorder %s33, %s36
    %p45 = scmp.eq.s32.totalorder %s14, 15
    %p46 = por %p44, %p45
    %p47 = scmp.ne.s32.totalorder %s36, %s37
    %p48 = scmp.eq.s32.totalorder %s14, 0
    %p49 = por %p47, %p48
    %p50 = scmp.ne.s32.totalorder %s36, %s37
    %p51 = scmp.eq.s32.totalorder %s15, 15
    %p52 = por %p50, %p51
    %p54 = scmp.ne.s32.totalorder %s37, %s53
    %p55 = scmp.eq.s32.totalorder %s15, 0
    %p56 = por %p54, %p55
    %s58 = sadd.s32 %s57, 1
    %p61 = scmp.eq.s32.totalorder %s9, 15
    %p62 = scmp.ne.s32.totalorder %s57, %s59
    %p63 = scmp.eq.s32.totalorder %s9, 0
    %p64 = por %p62, %p63
    %p65 = scmp.ne.s32.totalorder %s57, %s59
    %p66 = scmp.eq.s32.totalorder %s14, 15
    %p67 = por %p65, %p66
    %p68 = scmp.ne.s32.totalorder %s59, %s60
    %p69 = scmp.eq.s32.totalorder %s14, 0
    %p70 = por %p68, %p69
    %p71 = scmp.ne.s32.totalorder %s59, %s60
    %p72 = scmp.eq.s32.totalorder %s15, 15
    %p73 = por %p71, %p72
    %p75 = scmp.ne.s32.totalorder %s60, %s74
    %p76 = scmp.eq.s32.totalorder %s15, 0
    %p77 = por %p75, %p76
    %s79 = sadd.s32 %s78, 1
    %p82 = scmp.eq.s32.totalorder %s9, 15
    %p83 = scmp.ne.s32.totalorder %s78, %s80
    %p84 = scmp.eq.s32.totalorder %s9, 0
    %p85 = por %p83, %p84
    %p86 = scmp.ne.s32.totalorder %s78, %s80
    %p87 = scmp.eq.s32.totalorder %s14, 15
    %p88 = por %p86, %p87
    %p89 = scmp.ne.s32.totalorder %s80, %s81
    %p90 = scmp.eq.s32.totalorder %s14, 0
    %p91 = por %p89, %p90
    %p92 = scmp.ne.s32.totalorder %s80, %s81
    %p93 = scmp.eq.s32.totalorder %s15, 15
    %p94 = por %p92, %p93
    %p96 = scmp.ne.s32.totalorder %s81, %s95
    %p97 = scmp.eq.s32.totalorder %s15, 0
    %p98 = por %p96, %p97
    %s99 = ssub.s32 %s16, %s28
    %s100 = ssub.s32 %s17, %s24
    %s101 = sor.u32 %s99, %s100
    %p102 = scmp.eq.s32.totalorder %s101, 0
    %s104 = sadd.s32 %s103, 1
    %s105 = scalar_select %p102, %s103, %s104
    %p108 = pneg %p102
    %p109 = scmp.eq.s32.totalorder %s9, 15
    %p110 = por %p108, %p109
    %p111 = scmp.ne.s32.totalorder %s103, %s106
    %p112 = scmp.eq.s32.totalorder %s9, 0
    %p113 = por %p111, %p112
    %p114 = scmp.ne.s32.totalorder %s103, %s106
    %p115 = scmp.eq.s32.totalorder %s14, 15
    %p116 = por %p114, %p115
    %p117 = scmp.ne.s32.totalorder %s106, %s107
    %p118 = scmp.eq.s32.totalorder %s14, 0
    %p119 = por %p117, %p118
    %p120 = scmp.ne.s32.totalorder %s106, %s107
    %p121 = scmp.eq.s32.totalorder %s15, 15
    %p122 = por %p120, %p121
    %p124 = scmp.ne.s32.totalorder %s107, %s123
    %p125 = scmp.eq.s32.totalorder %s15, 0
    %p126 = por %p124, %p125
    %p127 = scmp.le.s32.totalorder 1, %s9
    %p128 = scmp.lt.s32.totalorder %s9, 17
    %p129 = pnand %p127, %p128
    %p130 = pneg %p129
    // Predicated region
    $region9: #{generator_forward.6} parent=5 // pred_check
      _
    $region10: #{generator_forward.6} parent=5 // pred_check_branch
      %132 = sbr.rel (%p129) target = $region12
    $region11: #{generator_forward.6} parent=5 // pred_region
      %s133 = ssub.s32 %s9, 1
      // Predicated region
      $region13: #{generator_forward.6} parent=11 // pred_check
        %p134 = pneg %p70
      $region14: #{generator_forward.6} parent=11 // pred_check_branch
        %136 = sbr.rel (%p134) target = $region16
      $region15: #{generator_forward.6} parent=11 // pred_region
        _
      $region16: #{generator_forward.6} parent=11 // pred_fallthru
        _
      // Predicated region
      $region17: #{generator_forward.6} parent=11 // pred_check
        %p137 = pneg %p91
      $region18: #{generator_forward.6} parent=11 // pred_check_branch
        %139 = sbr.rel (%p137) target = $region20
      $region19: #{generator_forward.6} parent=11 // pred_region
        _
      $region20: #{generator_forward.6} parent=11 // pred_fallthru
        _
    $region12: #{generator_forward.6} parent=5 // pred_fallthru
      _
    %p140 = scmp.lt.s32.totalorder %s9, 16
    // Predicated region
    $region21: #{generator_forward.6} parent=5 // pred_check
      %p141 = pneg %p140
    $region22: #{generator_forward.6} parent=5 // pred_check_branch
      %143 = sbr.rel (%p141) target = $region24
    $region23: #{generator_forward.6} parent=5 // pred_region
      // Predicated region
      $region25: #{generator_forward.6} parent=23 // pred_check
        %p144 = pneg %p43
      $region26: #{generator_forward.6} parent=23 // pred_check_branch
        %146 = sbr.rel (%p144) target = $region28
      $region27: #{generator_forward.6} parent=23 // pred_region
        %p147 = scmp.lt.s32.totalorder %s16, 15
        %s148 = scalar_select %p147, %s16, 15
        %p149 = scmp.lt.s32.totalorder %s17, 0
        %s150 = scalar_select %p149, %s17, 0
        %s151 = sadd.s32 %s150, %s148
        %s152 = smul.addr %s151, 8
        %s153 = scalar_lea.vmem %s0, %s152
      $region28: #{generator_forward.6} parent=23 // pred_fallthru
        _
    $region24: #{generator_forward.6} parent=5 // pred_fallthru
      _
    %p154 = scmp.le.s32.totalorder 1, %s9
    %p155 = scmp.lt.s32.totalorder %s9, 17
    %p156 = pnand %p154, %p155
    %p157 = pneg %p156
    // Predicated region
    $region29: #{generator_forward.6} parent=5 // pred_check
      _
    $region30: #{generator_forward.6} parent=5 // pred_check_branch
      %159 = sbr.rel (%p156) target = $region32
    $region31: #{generator_forward.6} parent=5 // pred_region
      %s160 = ssub.s32 %s9, 1
      %p161 = scmp.lt.s32.totalorder %s18, 15
      %s162 = scalar_select %p161, %s18, 15
      %p163 = scmp.lt.s32.totalorder %s19, 0
      %s164 = scalar_select %p163, %s19, 0
      %s165 = sadd.s32 %s164, %s162
      %s166 = smul.addr %s165, 8
      %s167 = scalar_lea.vmem %s0, %s166
      %p168 = pneg %p49
      %p169 = pneg %p46
      %p170 = pneg %p70
      %p171 = pneg %p67
      %p172 = pneg %p91
      %p173 = pneg %p88
      %p174 = pneg %p119
      %p175 = pneg %p116
      %p176 = scmp.lt.s32.totalorder %s18, 15
      %s177 = scalar_select %p176, %s18, 15
      %p178 = scmp.lt.s32.totalorder %s19, 0
      %s179 = scalar_select %p178, %s19, 0
      %s180 = sadd.s32 %s179, %s177
      %s181 = smul.addr %s180, 8
      %s182 = scalar_lea.vmem %s3, %s181
      %p183 = scmp.lt.s32.totalorder %s18, 15
      %s184 = scalar_select %p183, %s18, 15
      %p185 = scmp.lt.s32.totalorder %s19, 0
      %s186 = scalar_select %p185, %s19, 0
      %s187 = sadd.s32 %s186, %s184
      %s188 = smul.addr %s187, 8
      %s189 = scalar_lea.vmem %s0, %s188
      %p190 = scmp.lt.s32.totalorder %s18, 15
      %s191 = scalar_select %p190, %s18, 15
      %p192 = scmp.lt.s32.totalorder %s19, 0
      %s193 = scalar_select %p192, %s19, 0
      %s194 = sadd.s32 %s193, %s191
      %s195 = smul.addr %s194, 8
      %s196 = scalar_lea.vmem %s3, %s195
      %v197 = vld [vmem:[%s189] sm:$0xff]
      %v198 = vld [vmem:[%s1] sm:$0x1]
      %v200 = vlaneseq
      %v201 = vshrl.u32 %v200, 7
      %v202 = vsub.s32 0, %v201
      %v203 = vrot.slane %v198, %v202
      %v205 = vmul.f32 %v197, %v203
      %v206 = vld [vmem:[%s2] sm:$0x1]
      %v208 = vlaneseq
      %v209 = vshrl.u32 %v208, 7
      %v210 = vsub.s32 0, %v209
      %v211 = vrot.slane %v206, %v210
      %v213 = vadd.f32 %v205, %v211
      %vm214 = vcmp.gt.f32.partialorder %v213, 0.0
      %v215 = vmul.f32 %v213, 0.2
      %v216 = vsel %vm214, %v213, %v215
      %217 = vst [vmem:[%s196] sm:$0xff] %v216
      %p218 = scmp.lt.s32.totalorder %s18, 15
      %s219 = scalar_select %p218, %s18, 15
      %p220 = scmp.lt.s32.totalorder %s19, 0
      %s221 = scalar_select %p220, %s19, 0
      %s222 = sadd.s32 %s221, %s219
      %s223 = smul.addr %s222, 8
      %s224 = scalar_lea.vmem %s3, %s223
      // Predicated region
      $region33: #{generator_forward.6} parent=31 // pred_check
        %p225 = pneg %p116
      $region34: #{generator_forward.6} parent=31 // pred_check_branch
        %227 = sbr.rel (%p225) target = $region36
      $region35: #{generator_forward.6} parent=31 // pred_region
        _
      $region36: #{generator_forward.6} parent=31 // pred_fallthru
        _
    $region32: #{generator_forward.6} parent=5 // pred_fallthru
      _
    %p228 = scmp.le.s32.totalorder 2, %s9
    // Predicated region
    $region37: #{generator_forward.6} parent=5 // pred_check
      %p229 = pneg %p228
    $region38: #{generator_forward.6} parent=5 // pred_check_branch
      %231 = sbr.rel (%p229) target = $region40
    $region39: #{generator_forward.6} parent=5 // pred_region
      %s232 = ssub.s32 %s9, 2
      // Predicated region
      $region41: #{generator_forward.6} parent=39 // pred_check
        %p233 = pneg %p122
      $region42: #{generator_forward.6} parent=39 // pred_check_branch
        %235 = sbr.rel (%p233) target = $region44
      $region43: #{generator_forward.6} parent=39 // pred_region
        %p236 = scmp.lt.s32.totalorder %s20, 15
        %s237 = scalar_select %p236, %s20, 15
        %p238 = scmp.lt.s32.totalorder %s21, 0
        %s239 = scalar_select %p238, %s21, 0
        %s240 = sadd.s32 %s239, %s237
        %s241 = smul.addr %s240, 8
        %s242 = scalar_lea.vmem %s3, %s241
      $region44: #{generator_forward.6} parent=39 // pred_fallthru
        _
    $region40: #{generator_forward.6} parent=5 // pred_fallthru
      _
  $region6: #{generator_forward.6} parent=0 // loop_footer
    %s13 = sadd.s32 1, %s9
  $region7: #{generator_forward.6} parent=0 // loop_footer_branch
    %8 = sbr.rel target = $region3
  $region8: #{generator_forward.6} parent=0 // loop_exit
    _

// kernel: generator_forward.5
$region0: #{generator_forward.5}
  #allocation0 [shape = 'u32[]', space=smem, size = 0x4, offset = 0x4, fixed_abs, tag = 'smem constant byte address 0x4 - core index']
  #allocation1 [shape = 'u32[144,128]{1,0:T(1,128)}', space=vmem, size = 0x12000, scoped, tag = 'internal scratch']
  %s0 = inlined_call_operand.vmem [shape: f32[16,8,4], index: 0, kind: input, shape index: {}]
  %s1 = inlined_call_operand.vmem [shape: f32[16,4,128], index: 1, kind: input, shape index: {}]
  %s2 = inlined_call_operand.vmem [shape: f32[16,8,128], index: 2, kind: output, shape index: {0}]
  %s3 = inlined_call_operand.vmem [shape: f32[16,1,2,128], index: 3, kind: output, shape index: {1}]
  %4 = xla_tuple %s2, %s3
  %s5 = sld [smem:[#allocation0]]
  $region49: #{generator_forward.5} parent=0
    _
  %s7 = ssub.s32 1, %s5
  %s8 = scalar_select 0, %s7, %s5
  loop: start=0, step=1, limit=18
  $region2: #{generator_forward.5} parent=0 // loop_pre_header
    _
  $region3: #{generator_forward.5} parent=0 // loop_header
    %s10 = sphi 0, %s14
    %p11 = scmp.ge.s32.totalorder %s10, 18
    %s17 = sphi 0, %s29
    %s18 = sphi 0, %s25
    %s19 = sphi 0, %s17
    %s20 = sphi 0, %s18
    %s21 = sphi 0, %s19
    %s22 = sphi 0, %s20
    %s34 = sphi 0, %s36
    %s37 = sphi 0, %s34
    %s38 = sphi 0, %s37
    %s54 = sphi 0, %s38
    %s60 = sphi 0, %s62
    %s63 = sphi 0, %s60
    %s64 = sphi 0, %s63
    %s80 = sphi 0, %s64
    %s88 = sphi 0, %s90
    %s91 = sphi 0, %s88
    %s92 = sphi 0, %s91
    %s108 = sphi 0, %s92
    %s116 = sphi 0, %s118
    %s119 = sphi 0, %s116
    %s120 = sphi 0, %s119
    %s136 = sphi 0, %s120
  $region4: #{generator_forward.5} parent=0 // loop_header_branch
    %13 = sbr.rel (%p11) target = $region8
  $region5: #{generator_forward.5} parent=0 // loop_body
    %s15 = ssub.s32 %s10, 1
    %s16 = ssub.s32 %s10, 2
    %s23 = sadd.s32 1, %s18
    %p24 = scmp.ge.s32.totalorder %s23, 1
    %s25 = scalar_select %p24, 0, %s23
    %s26 = sadd.s32 1, %s17
    %s27 = scalar_select %p24, %s26, %s17
    %p28 = scmp.ge.s32.totalorder %s27, 16
    %s29 = scalar_select %p28, 0, %s27
    %s30 = ssub.s32 %s17, %s29
    %s31 = ssub.s32 %s18, %s25
    %s32 = sor.u32 %s30, %s31
    %p33 = scmp.eq.s32.totalorder %s32, 0
    %s35 = sadd.s32 %s34, 1
    %s36 = scalar_select %p33, %s34, %s35
    %p39 = pneg %p33
    %p40 = scmp.eq.s32.totalorder %s10, 15
    %p41 = por %p39, %p40
    %p42 = scmp.ne.s32.totalorder %s34, %s37
    %p43 = scmp.eq.s32.totalorder %s10, 0
    %p44 = por %p42, %p43
    %p45 = scmp.ne.s32.totalorder %s34, %s37
    %p46 = scmp.eq.s32.totalorder %s15, 15
    %p47 = por %p45, %p46
    %p48 = scmp.ne.s32.totalorder %s37, %s38
    %p49 = scmp.eq.s32.totalorder %s15, 0
    %p50 = por %p48, %p49
    %p51 = scmp.ne.s32.totalorder %s37, %s38
    %p52 = scmp.eq.s32.totalorder %s16, 15
    %p53 = por %p51, %p52
    %p55 = scmp.ne.s32.totalorder %s38, %s54
    %p56 = scmp.eq.s32.totalorder %s16, 0
    %p57 = por %p55, %p56
    %s58 = ssub.s32 %s17, %s29
    %p59 = scmp.eq.s32.totalorder %s58, 0
    %s61 = sadd.s32 %s60, 1
    %s62 = scalar_select %p59, %s60, %s61
    %p65 = pneg %p59
    %p66 = scmp.eq.s32.totalorder %s10, 15
    %p67 = por %p65, %p66
    %p68 = scmp.ne.s32.totalorder %s60, %s63
    %p69 = scmp.eq.s32.totalorder %s10, 0
    %p70 = por %p68, %p69
    %p71 = scmp.ne.s32.totalorder %s60, %s63
    %p72 = scmp.eq.s32.totalorder %s15, 15
    %p73 = por %p71, %p72
    %p74 = scmp.ne.s32.totalorder %s63, %s64
    %p75 = scmp.eq.s32.totalorder %s15, 0
    %p76 = por %p74, %p75
    %p77 = scmp.ne.s32.totalorder %s63, %s64
    %p78 = scmp.eq.s32.totalorder %s16, 15
    %p79 = por %p77, %p78
    %p81 = scmp.ne.s32.totalorder %s64, %s80
    %p82 = scmp.eq.s32.totalorder %s16, 0
    %p83 = por %p81, %p82
    %s84 = ssub.s32 %s17, %s29
    %s85 = ssub.s32 %s18, %s25
    %s86 = sor.u32 %s84, %s85
    %p87 = scmp.eq.s32.totalorder %s86, 0
    %s89 = sadd.s32 %s88, 1
    %s90 = scalar_select %p87, %s88, %s89
    %p93 = pneg %p87
    %p94 = scmp.eq.s32.totalorder %s10, 15
    %p95 = por %p93, %p94
    %p96 = scmp.ne.s32.totalorder %s88, %s91
    %p97 = scmp.eq.s32.totalorder %s10, 0
    %p98 = por %p96, %p97
    %p99 = scmp.ne.s32.totalorder %s88, %s91
    %p100 = scmp.eq.s32.totalorder %s15, 15
    %p101 = por %p99, %p100
    %p102 = scmp.ne.s32.totalorder %s91, %s92
    %p103 = scmp.eq.s32.totalorder %s15, 0
    %p104 = por %p102, %p103
    %p105 = scmp.ne.s32.totalorder %s91, %s92
    %p106 = scmp.eq.s32.totalorder %s16, 15
    %p107 = por %p105, %p106
    %p109 = scmp.ne.s32.totalorder %s92, %s108
    %p110 = scmp.eq.s32.totalorder %s16, 0
    %p111 = por %p109, %p110
    %s112 = ssub.s32 %s17, %s29
    %s113 = ssub.s32 %s18, %s25
    %s114 = sor.u32 %s112, %s113
    %p115 = scmp.eq.s32.totalorder %s114, 0
    %s117 = sadd.s32 %s116, 1
    %s118 = scalar_select %p115, %s116, %s117
    %p121 = pneg %p115
    %p122 = scmp.eq.s32.totalorder %s10, 15
    %p123 = por %p121, %p122
    %p124 = scmp.ne.s32.totalorder %s116, %s119
    %p125 = scmp.eq.s32.totalorder %s10, 0
    %p126 = por %p124, %p125
    %p127 = scmp.ne.s32.totalorder %s116, %s119
    %p128 = scmp.eq.s32.totalorder %s15, 15
    %p129 = por %p127, %p128
    %p130 = scmp.ne.s32.totalorder %s119, %s120
    %p131 = scmp.eq.s32.totalorder %s15, 0
    %p132 = por %p130, %p131
    %p133 = scmp.ne.s32.totalorder %s119, %s120
    %p134 = scmp.eq.s32.totalorder %s16, 15
    %p135 = por %p133, %p134
    %p137 = scmp.ne.s32.totalorder %s120, %s136
    %p138 = scmp.eq.s32.totalorder %s16, 0
    %p139 = por %p137, %p138
    %p140 = scmp.le.s32.totalorder 1, %s10
    %p141 = scmp.lt.s32.totalorder %s10, 17
    %p142 = pnand %p140, %p141
    %p143 = pneg %p142
    // Predicated region
    $region9: #{generator_forward.5} parent=5 // pred_check
      _
    $region10: #{generator_forward.5} parent=5 // pred_check_branch
      %145 = sbr.rel (%p142) target = $region12
    $region11: #{generator_forward.5} parent=5 // pred_region
      %s146 = ssub.s32 %s10, 1
    $region12: #{generator_forward.5} parent=5 // pred_fallthru
      _
    %p147 = scmp.lt.s32.totalorder %s10, 16
    // Predicated region
    $region13: #{generator_forward.5} parent=5 // pred_check
      %p148 = pneg %p147
    $region14: #{generator_forward.5} parent=5 // pred_check_branch
      %150 = sbr.rel (%p148) target = $region16
    $region15: #{generator_forward.5} parent=5 // pred_region
      // Predicated region
      $region17: #{generator_forward.5} parent=15 // pred_check
        %p151 = pneg %p44
      $region18: #{generator_forward.5} parent=15 // pred_check_branch
        %153 = sbr.rel (%p151) target = $region20
      $region19: #{generator_forward.5} parent=15 // pred_region
        %p154 = scmp.lt.s32.totalorder %s17, 15
        %s155 = scalar_select %p154, %s17, 15
        %p156 = scmp.lt.s32.totalorder %s18, 0
        %s157 = scalar_select %p156, %s18, 0
        %s158 = sadd.s32 %s157, %s155
        %s159 = smul.addr %s158, 8
        %s160 = scalar_lea.vmem %s0, %s159
      $region20: #{generator_forward.5} parent=15 // pred_fallthru
        _
      // Predicated region
      $region21: #{generator_forward.5} parent=15 // pred_check
        %p161 = pneg %p70
      $region22: #{generator_forward.5} parent=15 // pred_check_branch
        %163 = sbr.rel (%p161) target = $region24
      $region23: #{generator_forward.5} parent=15 // pred_region
        %p164 = scmp.lt.s32.totalorder %s17, 15
        %s165 = scalar_select %p164, %s17, 15
        %s166 = smul.addr %s165, 4
        %s167 = scalar_lea.vmem %s1, %s166
      $region24: #{generator_forward.5} parent=15 // pred_fallthru
        _
    $region16: #{generator_forward.5} parent=5 // pred_fallthru
      _
    %p168 = scmp.le.s32.totalorder 1, %s10
    %p169 = scmp.lt.s32.totalorder %s10, 17
    %p170 = pnand %p168, %p169
    %p171 = pneg %p170
    // Predicated region
    $region25: #{generator_forward.5} parent=5 // pred_check
      _
    $region26: #{generator_forward.5} parent=5 // pred_check_branch
      %173 = sbr.rel (%p170) target = $region28
    $region27: #{generator_forward.5} parent=5 // pred_region
      %s174 = ssub.s32 %s10, 1
      %p175 = scmp.lt.s32.totalorder %s19, 15
      %s176 = scalar_select %p175, %s19, 15
      %p177 = scmp.lt.s32.totalorder %s20, 0
      %s178 = scalar_select %p177, %s20, 0
      %s179 = sadd.s32 %s178, %s176
      %s180 = smul.addr %s179, 8
      %s181 = scalar_lea.vmem %s0, %s180
      %p182 = pneg %p50
      %p183 = pneg %p47
      %p184 = scmp.lt.s32.totalorder %s19, 15
      %s185 = scalar_select %p184, %s19, 15
      %s186 = smul.addr %s185, 4
      %s187 = scalar_lea.vmem %s1, %s186
      %p188 = pneg %p76
      %p189 = pneg %p73
      %p190 = pneg %p104
      %p191 = pneg %p101
      %p192 = scmp.lt.s32.totalorder %s19, 15
      %s193 = scalar_select %p192, %s19, 15
      %p194 = scmp.lt.s32.totalorder %s20, 0
      %s195 = scalar_select %p194, %s20, 0
      %s196 = sadd.s32 %s195, %s193
      %s197 = smul.addr %s196, 8
      %s198 = scalar_lea.vmem %s2, %s197
      %p199 = pneg %p132
      %p200 = pneg %p129
      %p201 = scmp.lt.s32.totalorder %s19, 15
      %s202 = scalar_select %p201, %s19, 15
      %p203 = scmp.lt.s32.totalorder %s20, 0
      %s204 = scalar_select %p203, %s20, 0
      %s205 = sadd.s32 %s204, %s202
      %s206 = smul.addr %s205, 2
      %s207 = scalar_lea.vmem %s3, %s206
      %p208 = scmp.lt.s32.totalorder %s19, 15
      %s209 = scalar_select %p208, %s19, 15
      %p210 = scmp.lt.s32.totalorder %s20, 0
      %s211 = scalar_select %p210, %s20, 0
      %s212 = sadd.s32 %s211, %s209
      %s213 = smul.addr %s212, 8
      %s214 = scalar_lea.vmem %s0, %s213
      %p215 = scmp.lt.s32.totalorder %s19, 15
      %s216 = scalar_select %p215, %s19, 15
      %s217 = smul.addr %s216, 4
      %s218 = scalar_lea.vmem %s1, %s217
      %p219 = scmp.lt.s32.totalorder %s19, 15
      %s220 = scalar_select %p219, %s19, 15
      %p221 = scmp.lt.s32.totalorder %s20, 0
      %s222 = scalar_select %p221, %s20, 0
      %s223 = sadd.s32 %s222, %s220
      %s224 = smul.addr %s223, 8
      %s225 = scalar_lea.vmem %s2, %s224
      %p226 = scmp.lt.s32.totalorder %s19, 15
      %s227 = scalar_select %p226, %s19, 15
      %p228 = scmp.lt.s32.totalorder %s20, 0
      %s229 = scalar_select %p228, %s20, 0
      %s230 = sadd.s32 %s229, %s227
      %s231 = smul.addr %s230, 2
      %s232 = scalar_lea.vmem %s3, %s231
      %v234 = vld [vmem:[%s214] sm:$0xff]
      %v235 = vpack.c.bf16 %v234, %v234
      %v236 = vld [vmem:[%s218] sm:$0xf]
      %v237 = vpack.c.bf16 %v236, %v236
      %vm238 = vcmask 31744
      %v240 = vsel %vm238, %v235, 0
      %vm242 = vcmask 1041408
      %v244 = vsel %vm242, %v237, 0
      %246 = vmatprep.subr.bf16.mxu0 0
      %247 = vmatpush1.bf16.msra.mxu0 0
      %248 = vmatprep.subr.bf16.mxu0 0
      %249 = vmatpush1.bf16.msra.mxu0 0
      %250 = vmatprep.subr.bf16.mxu0 0
      %251 = vmatpush1.bf16.msra.mxu0 0
      %252 = vmatprep.subr.bf16.mxu0 0
      %253 = vmatpush1.bf16.msra.mxu0 0
      %254 = vmatprep.subr.bf16.mxu0 0
      %255 = vmatpush1.bf16.msra.mxu0 0
      %256 = vmatprep.subr.bf16.mxu0 0
      %257 = vmatpush1.bf16.msra.mxu0 0
      %258 = vmatprep.subr.bf16.mxu0 0
      %259 = vmatpush1.bf16.msra.mxu0 0
      %260 = vmatprep.subr.bf16.mxu0 0
      %261 = vmatpush1.bf16.msra.mxu0 %v244
      %262 = vmatprep.subr.bf16.mxu0 0
      %263 = vmatpush2.bf16.msra.mxu0 0
      %264 = vmatprep.subr.bf16.mxu0 0
      %265 = vmatpush2.bf16.msra.mxu0 0
      %266 = vmatprep.subr.bf16.mxu0 0
      %267 = vmatpush2.bf16.msra.mxu0 0
      %268 = vmatprep.subr.bf16.mxu0 0
      %269 = vmatpush2.bf16.msra.mxu0 0
      %270 = vmatprep.subr.bf16.mxu0 0
      %271 = vmatpush2.bf16.msra.mxu0 0
      %272 = vmatprep.subr.bf16.mxu0 0
      %273 = vmatpush2.bf16.msra.mxu0 0
      %274 = vmatprep.subr.bf16.mxu0 0
      %275 = vmatpush2.bf16.msra.mxu0 0
      %276 = vmatprep.subr.bf16.mxu0 0
      %277 = vmatpush2.bf16.msra.mxu0 0
      %278 = vmatprep.mubr.bf16.mxu0 0
      %279 = vmatmul.mubr.bf16.gmra.mxu0 %v240
      %v280 = vpop.f32.mrf.mxu0
      %v281 = vadd.f32 0.0, %v280
      %v282 = vpop.f32.mrf.mxu0
      %v283 = vpop.f32.mrf.mxu0
      %v284 = vpop.f32.mrf.mxu0
      %285 = vdwg.mxu0
      %286 = vst [vmem:[%s225] sm:$0xff] %v281
      %v287 = vrot.slane %v281, 4
      %v288 = vadd.f32 %v281, %v287
      %v289 = vrot.slane %v288, 2
      %v290 = vadd.f32 %v288, %v289
      %v291 = vrot.slane %v290, 1
      %v292 = vadd.f32 %v290, %v291
      %v293 = vmul.f32 %v281, %v281
      %v294 = vrot.slane %v293, 4
      %v295 = vadd.f32 %v293, %v294
      %v296 = vrot.slane %v295, 2
      %v297 = vadd.f32 %v295, %v296
      %v298 = vrot.slane %v297, 1
      %v299 = vadd.f32 %v297, %v298
      %vm300 = vcmask 1040384
      %v301 = vsel %vm300, %v292, %v299
      %302 = vst [vmem:[%s232] sm:$0x3] %v301
      %p303 = scmp.lt.s32.totalorder %s19, 15
      %s304 = scalar_select %p303, %s19, 15
      %p305 = scmp.lt.s32.totalorder %s20, 0
      %s306 = scalar_select %p305, %s20, 0
      %s307 = sadd.s32 %s306, %s304
      %s308 = smul.addr %s307, 8
      %s309 = scalar_lea.vmem %s2, %s308
      %p310 = scmp.lt.s32.totalorder %s19, 15
      %s311 = scalar_select %p310, %s19, 15
      %p312 = scmp.lt.s32.totalorder %s20, 0
      %s313 = scalar_select %p312, %s20, 0
      %s314 = sadd.s32 %s313, %s311
      %s315 = smul.addr %s314, 2
      %s316 = scalar_lea.vmem %s3, %s315
      // Predicated region
      $region29: #{generator_forward.5} parent=27 // pred_check
        %p317 = pneg %p101
      $region30: #{generator_forward.5} parent=27 // pred_check_branch
        %319 = sbr.rel (%p317) target = $region32
      $region31: #{generator_forward.5} parent=27 // pred_region
        _
      $region32: #{generator_forward.5} parent=27 // pred_fallthru
        _
      // Predicated region
      $region33: #{generator_forward.5} parent=27 // pred_check
        %p320 = pneg %p129
      $region34: #{generator_forward.5} parent=27 // pred_check_branch
        %322 = sbr.rel (%p320) target = $region36
      $region35: #{generator_forward.5} parent=27 // pred_region
        _
      $region36: #{generator_forward.5} parent=27 // pred_fallthru
        _
    $region28: #{generator_forward.5} parent=5 // pred_fallthru
      _
    %p323 = scmp.le.s32.totalorder 2, %s10
    // Predicated region
    $region37: #{generator_forward.5} parent=5 // pred_check
      %p324 = pneg %p323
    $region38: #{generator_forward.5} parent=5 // pred_check_branch
      %326 = sbr.rel (%p324) target = $region40
    $region39: #{generator_forward.5} parent=5 // pred_region
      %s327 = ssub.s32 %s10, 2
      // Predicated region
      $region41: #{generator_forward.5} parent=39 // pred_check
        %p328 = pneg %p107
      $region42: #{generator_forward.5} parent=39 // pred_check_branch
        %330 = sbr.rel (%p328) target = $region44
      $region43: #{generator_forward.5} parent=39 // pred_region
        %p331 = scmp.lt.s32.totalorder %s21, 15
        %s332 = scalar_select %p331, %s21, 15
        %p333 = scmp.lt.s32.totalorder %s22, 0
        %s334 = scalar_select %p333, %s22, 0
        %s335 = sadd.s32 %s334, %s332
        %s336 = smul.addr %s335, 8
        %s337 = scalar_lea.vmem %s2, %s336
      $region44: #{generator_forward.5} parent=39 // pred_fallthru
        _
      // Predicated region
      $region45: #{generator_forward.5} parent=39 // pred_check
        %p338 = pneg %p135
      $region46: #{generator_forward.5} parent=39 // pred_check_branch
        %340 = sbr.rel (%p338) target = $region48
      $region47: #{generator_forward.5} parent=39 // pred_region
        %p341 = scmp.lt.s32.totalorder %s21, 15
        %s342 = scalar_select %p341, %s21, 15
        %p343 = scmp.lt.s32.totalorder %s22, 0
        %s344 = scalar_select %p343, %s22, 0
        %s345 = sadd.s32 %s344, %s342
        %s346 = smul.addr %s345, 2
        %s347 = scalar_lea.vmem %s3, %s346
      $region48: #{generator_forward.5} parent=39 // pred_fallthru
        _
    $region40: #{generator_forward.5} parent=5 // pred_fallthru
      _
  $region6: #{generator_forward.5} parent=0 // loop_footer
    %s14 = sadd.s32 1, %s10
  $region7: #{generator_forward.5} parent=0 // loop_footer_branch
    %9 = sbr.rel target = $region3
  $region8: #{generator_forward.5} parent=0 // loop_exit
    _

// kernel: generator_forward.8
$region0: #{generator_forward.8}
  #allocation0 [shape = 'u32[]', space=smem, size = 0x4, offset = 0x4, fixed_abs, tag = 'smem constant byte address 0x4 - core index']
  #allocation1 [shape = 'u32[144,128]{1,0:T(1,128)}', space=vmem, size = 0x12000, scoped, tag = 'internal scratch']
  %s0 = inlined_call_operand.vmem [shape: f32[4,32,128], index: 0, kind: input, shape index: {}]
  %s1 = inlined_call_operand.vmem [shape: f32[1,128], index: 1, kind: input, shape index: {}]
  %s2 = inlined_call_operand.vmem [shape: f32[1,128], index: 2, kind: input, shape index: {}]
  %s3 = inlined_call_operand.vmem [shape: f32[4,32,128], index: 3, kind: output, shape index: {}]
  %s4 = sld [smem:[#allocation0]]
  $region45: #{generator_forward.8} parent=0
    _
  %s6 = ssub.s32 1, %s4
  %s7 = scalar_select 0, %s6, %s4
  loop: start=0, step=1, limit=6
  $region2: #{generator_forward.8} parent=0 // loop_pre_header
    _
  $region3: #{generator_forward.8} parent=0 // loop_header
    %s9 = sphi 0, %s13
    %p10 = scmp.ge.s32.totalorder %s9, 6
    %s16 = sphi 0, %s28
    %s17 = sphi 0, %s24
    %s18 = sphi 0, %s16
    %s19 = sphi 0, %s17
    %s20 = sphi 0, %s18
    %s21 = sphi 0, %s19
    %s33 = sphi 0, %s35
    %s36 = sphi 0, %s33
    %s37 = sphi 0, %s36
    %s53 = sphi 0, %s37
    %s57 = sphi 0, %s57
    %s59 = sphi 0, %s57
    %s60 = sphi 0, %s59
    %s74 = sphi 0, %s60
    %s78 = sphi 0, %s78
    %s80 = sphi 0, %s78
    %s81 = sphi 0, %s80
    %s95 = sphi 0, %s81
    %s103 = sphi 0, %s105
    %s106 = sphi 0, %s103
    %s107 = sphi 0, %s106
    %s123 = sphi 0, %s107
  $region4: #{generator_forward.8} parent=0 // loop_header_branch
    %12 = sbr.rel (%p10) target = $region8
  $region5: #{generator_forward.8} parent=0 // loop_body
    %s14 = ssub.s32 %s9, 1
    %s15 = ssub.s32 %s9, 2
    %s22 = sadd.s32 1, %s17
    %p23 = scmp.ge.s32.totalorder %s22, 1
    %s24 = scalar_select %p23, 0, %s22
    %s25 = sadd.s32 1, %s16
    %s26 = scalar_select %p23, %s25, %s16
    %p27 = scmp.ge.s32.totalorder %s26, 4
    %s28 = scalar_select %p27, 0, %s26
    %s29 = ssub.s32 %s16, %s28
    %s30 = ssub.s32 %s17, %s24
    %s31 = sor.u32 %s29, %s30
    %p32 = scmp.eq.s32.totalorder %s31, 0
    %s34 = sadd.s32 %s33, 1
    %s35 = scalar_select %p32, %s33, %s34
    %p38 = pneg %p32
    %p39 = scmp.eq.s32.totalorder %s9, 3
    %p40 = por %p38, %p39
    %p41 = scmp.ne.s32.totalorder %s33, %s36
    %p42 = scmp.eq.s32.totalorder %s9, 0
    %p43 = por %p41, %p42
    %p44 = scmp.ne.s32.totalorder %s33, %s36
    %p45 = scmp.eq.s32.totalorder %s14, 3
    %p46 = por %p44, %p45
    %p47 = scmp.ne.s32.totalorder %s36, %s37
    %p48 = scmp.eq.s32.totalorder %s14, 0
    %p49 = por %p47, %p48
    %p50 = scmp.ne.s32.totalorder %s36, %s37
    %p51 = scmp.eq.s32.totalorder %s15, 3
    %p52 = por %p50, %p51
    %p54 = scmp.ne.s32.totalorder %s37, %s53
    %p55 = scmp.eq.s32.totalorder %s15, 0
    %p56 = por %p54, %p55
    %s58 = sadd.s32 %s57, 1
    %p61 = scmp.eq.s32.totalorder %s9, 3
    %p62 = scmp.ne.s32.totalorder %s57, %s59
    %p63 = scmp.eq.s32.totalorder %s9, 0
    %p64 = por %p62, %p63
    %p65 = scmp.ne.s32.totalorder %s57, %s59
    %p66 = scmp.eq.s32.totalorder %s14, 3
    %p67 = por %p65, %p66
    %p68 = scmp.ne.s32.totalorder %s59, %s60
    %p69 = scmp.eq.s32.totalorder %s14, 0
    %p70 = por %p68, %p69
    %p71 = scmp.ne.s32.totalorder %s59, %s60
    %p72 = scmp.eq.s32.totalorder %s15, 3
    %p73 = por %p71, %p72
    %p75 = scmp.ne.s32.totalorder %s60, %s74
    %p76 = scmp.eq.s32.totalorder %s15, 0
    %p77 = por %p75, %p76
    %s79 = sadd.s32 %s78, 1
    %p82 = scmp.eq.s32.totalorder %s9, 3
    %p83 = scmp.ne.s32.totalorder %s78, %s80
    %p84 = scmp.eq.s32.totalorder %s9, 0
    %p85 = por %p83, %p84
    %p86 = scmp.ne.s32.totalorder %s78, %s80
    %p87 = scmp.eq.s32.totalorder %s14, 3
    %p88 = por %p86, %p87
    %p89 = scmp.ne.s32.totalorder %s80, %s81
    %p90 = scmp.eq.s32.totalorder %s14, 0
    %p91 = por %p89, %p90
    %p92 = scmp.ne.s32.totalorder %s80, %s81
    %p93 = scmp.eq.s32.totalorder %s15, 3
    %p94 = por %p92, %p93
    %p96 = scmp.ne.s32.totalorder %s81, %s95
    %p97 = scmp.eq.s32.totalorder %s15, 0
    %p98 = por %p96, %p97
    %s99 = ssub.s32 %s16, %s28
    %s100 = ssub.s32 %s17, %s24
    %s101 = sor.u32 %s99, %s100
    %p102 = scmp.eq.s32.totalorder %s101, 0
    %s104 = sadd.s32 %s103, 1
    %s105 = scalar_select %p102, %s103, %s104
    %p108 = pneg %p102
    %p109 = scmp.eq.s32.totalorder %s9, 3
    %p110 = por %p108, %p109
    %p111 = scmp.ne.s32.totalorder %s103, %s106
    %p112 = scmp.eq.s32.totalorder %s9, 0
    %p113 = por %p111, %p112
    %p114 = scmp.ne.s32.totalorder %s103, %s106
    %p115 = scmp.eq.s32.totalorder %s14, 3
    %p116 = por %p114, %p115
    %p117 = scmp.ne.s32.totalorder %s106, %s107
    %p118 = scmp.eq.s32.totalorder %s14, 0
    %p119 = por %p117, %p118
    %p120 = scmp.ne.s32.totalorder %s106, %s107
    %p121 = scmp.eq.s32.totalorder %s15, 3
    %p122 = por %p120, %p121
    %p124 = scmp.ne.s32.totalorder %s107, %s123
    %p125 = scmp.eq.s32.totalorder %s15, 0
    %p126 = por %p124, %p125
    %p127 = scmp.le.s32.totalorder 1, %s9
    %p128 = scmp.lt.s32.totalorder %s9, 5
    %p129 = pnand %p127, %p128
    %p130 = pneg %p129
    // Predicated region
    $region9: #{generator_forward.8} parent=5 // pred_check
      _
    $region10: #{generator_forward.8} parent=5 // pred_check_branch
      %132 = sbr.rel (%p129) target = $region12
    $region11: #{generator_forward.8} parent=5 // pred_region
      %s133 = ssub.s32 %s9, 1
      // Predicated region
      $region13: #{generator_forward.8} parent=11 // pred_check
        %p134 = pneg %p70
      $region14: #{generator_forward.8} parent=11 // pred_check_branch
        %136 = sbr.rel (%p134) target = $region16
      $region15: #{generator_forward.8} parent=11 // pred_region
        _
      $region16: #{generator_forward.8} parent=11 // pred_fallthru
        _
      // Predicated region
      $region17: #{generator_forward.8} parent=11 // pred_check
        %p137 = pneg %p91
      $region18: #{generator_forward.8} parent=11 // pred_check_branch
        %139 = sbr.rel (%p137) target = $region20
      $region19: #{generator_forward.8} parent=11 // pred_region
        _
      $region20: #{generator_forward.8} parent=11 // pred_fallthru
        _
    $region12: #{generator_forward.8} parent=5 // pred_fallthru
      _
    %p140 = scmp.lt.s32.totalorder %s9, 4
    // Predicated region
    $region21: #{generator_forward.8} parent=5 // pred_check
      %p141 = pneg %p140
    $region22: #{generator_forward.8} parent=5 // pred_check_branch
      %143 = sbr.rel (%p141) target = $region24
    $region23: #{generator_forward.8} parent=5 // pred_region
      // Predicated region
      $region25: #{generator_forward.8} parent=23 // pred_check
        %p144 = pneg %p43
      $region26: #{generator_forward.8} parent=23 // pred_check_branch
        %146 = sbr.rel (%p144) target = $region28
      $region27: #{generator_forward.8} parent=23 // pred_region
        %s147 = smul.u32 4, %s17
        %p148 = scmp.lt.s32.totalorder %s16, 3
        %s149 = scalar_select %p148, %s16, 3
        %p150 = scmp.lt.s32.totalorder %s147, 3
        %s151 = scalar_select %p150, %s147, 3
        %s152 = smul.addr %s149, 4
        %s153 = sadd.s32 %s151, %s152
        %s154 = smul.addr %s153, 8
        %s155 = scalar_lea.vmem %s0, %s154
        %s156 = smul.u32 4, %s17
      $region28: #{generator_forward.8} parent=23 // pred_fallthru
        _
    $region24: #{generator_forward.8} parent=5 // pred_fallthru
      _
    %p157 = scmp.le.s32.totalorder 1, %s9
    %p158 = scmp.lt.s32.totalorder %s9, 5
    %p159 = pnand %p157, %p158
    %p160 = pneg %p159
    // Predicated region
    $region29: #{generator_forward.8} parent=5 // pred_check
      _
    $region30: #{generator_forward.8} parent=5 // pred_check_branch
      %162 = sbr.rel (%p159) target = $region32
    $region31: #{generator_forward.8} parent=5 // pred_region
      %s163 = ssub.s32 %s9, 1
      %s164 = smul.u32 4, %s19
      %p165 = scmp.lt.s32.totalorder %s18, 3
      %s166 = scalar_select %p165, %s18, 3
      %p167 = scmp.lt.s32.totalorder %s164, 3
      %s168 = scalar_select %p167, %s164, 3
      %s169 = smul.addr %s166, 4
      %s170 = sadd.s32 %s168, %s169
      %s171 = smul.addr %s170, 8
      %s172 = scalar_lea.vmem %s0, %s171
      %p173 = pneg %p49
      %p174 = pneg %p46
      %p175 = pneg %p70
      %p176 = pneg %p67
      %p177 = pneg %p91
      %p178 = pneg %p88
      %p179 = pneg %p119
      %p180 = pneg %p116
      %s181 = smul.u32 4, %s19
      %p182 = scmp.lt.s32.totalorder %s18, 3
      %s183 = scalar_select %p182, %s18, 3
      %p184 = scmp.lt.s32.totalorder %s181, 3
      %s185 = scalar_select %p184, %s181, 3
      %s186 = smul.addr %s183, 4
      %s187 = sadd.s32 %s185, %s186
      %s188 = smul.addr %s187, 8
      %s189 = scalar_lea.vmem %s3, %s188
      %s190 = smul.u32 4, %s19
      %p191 = scmp.lt.s32.totalorder %s18, 3
      %s192 = scalar_select %p191, %s18, 3
      %p193 = scmp.lt.s32.totalorder %s190, 3
      %s194 = scalar_select %p193, %s190, 3
      %s195 = smul.addr %s192, 4
      %s196 = sadd.s32 %s194, %s195
      %s197 = smul.addr %s196, 8
      %s198 = scalar_lea.vmem %s0, %s197
      %s199 = smul.u32 4, %s19
      %s200 = smul.u32 4, %s19
      %p201 = scmp.lt.s32.totalorder %s18, 3
      %s202 = scalar_select %p201, %s18, 3
      %p203 = scmp.lt.s32.totalorder %s200, 3
      %s204 = scalar_select %p203, %s200, 3
      %s205 = smul.addr %s202, 4
      %s206 = sadd.s32 %s204, %s205
      %s207 = smul.addr %s206, 8
      %s208 = scalar_lea.vmem %s3, %s207
      %s209 = smul.u32 4, %s19
      %v210 = vld [vmem:[%s198] sm:$0xff]
      %v211 = vld [vmem:[%s198 + $0x8] sm:$0xff]
      %v212 = vld [vmem:[%s198 + $0x10] sm:$0xff]
      %v213 = vld [vmem:[%s198 + $0x18] sm:$0xff]
      %v214 = vld [vmem:[%s1] sm:$0x1]
      %v216 = vlaneseq
      %v217 = vshrl.u32 %v216, 7
      %v218 = vsub.s32 0, %v217
      %v219 = vrot.slane %v214, %v218
      %v221 = vmul.f32 %v210, %v219
      %v222 = vmul.f32 %v211, %v219
      %v223 = vmul.f32 %v212, %v219
      %v224 = vmul.f32 %v213, %v219
      %v225 = vld [vmem:[%s2] sm:$0x1]
      %v227 = vlaneseq
      %v228 = vshrl.u32 %v227, 7
      %v229 = vsub.s32 0, %v228
      %v230 = vrot.slane %v225, %v229
      %v232 = vadd.f32 %v221, %v230
      %v233 = vadd.f32 %v222, %v230
      %v234 = vadd.f32 %v223, %v230
      %v235 = vadd.f32 %v224, %v230
      %vm236 = vcmp.gt.f32.partialorder %v232, 0.0
      %vm237 = vcmp.gt.f32.partialorder %v233, 0.0
      %vm238 = vcmp.gt.f32.partialorder %v234, 0.0
      %vm239 = vcmp.gt.f32.partialorder %v235, 0.0
      %v240 = vmul.f32 %v232, 0.2
      %v241 = vmul.f32 %v233, 0.2
      %v242 = vmul.f32 %v234, 0.2
      %v243 = vmul.f32 %v235, 0.2
      %v244 = vsel %vm236, %v232, %v240
      %v245 = vsel %vm237, %v233, %v241
      %v246 = vsel %vm238, %v234, %v242
      %v247 = vsel %vm239, %v235, %v243
      %248 = vst [vmem:[%s208] sm:$0xff] %v244
      %249 = vst [vmem:[%s208 + $0x8] sm:$0xff] %v245
      %250 = vst [vmem:[%s208 + $0x10] sm:$0xff] %v246
      %251 = vst [vmem:[%s208 + $0x18] sm:$0xff] %v247
      %s252 = smul.u32 4, %s19
      %p253 = scmp.lt.s32.totalorder %s18, 3
      %s254 = scalar_select %p253, %s18, 3
      %p255 = scmp.lt.s32.totalorder %s252, 3
      %s256 = scalar_select %p255, %s252, 3
      %s257 = smul.addr %s254, 4
      %s258 = sadd.s32 %s256, %s257
      %s259 = smul.addr %s258, 8
      %s260 = scalar_lea.vmem %s3, %s259
      // Predicated region
      $region33: #{generator_forward.8} parent=31 // pred_check
        %p261 = pneg %p116
      $region34: #{generator_forward.8} parent=31 // pred_check_branch
        %263 = sbr.rel (%p261) target = $region36
      $region35: #{generator_forward.8} parent=31 // pred_region
        %s264 = smul.u32 4, %s19
      $region36: #{generator_forward.8} parent=31 // pred_fallthru
        _
    $region32: #{generator_forward.8} parent=5 // pred_fallthru
      _
    %p265 = scmp.le.s32.totalorder 2, %s9
    // Predicated region
    $region37: #{generator_forward.8} parent=5 // pred_check
      %p266 = pneg %p265
    $region38: #{generator_forward.8} parent=5 // pred_check_branch
      %268 = sbr.rel (%p266) target = $region40
    $region39: #{generator_forward.8} parent=5 // pred_region
      %s269 = ssub.s32 %s9, 2
      // Predicated region
      $region41: #{generator_forward.8} parent=39 // pred_check
        %p270 = pneg %p122
      $region42: #{generator_forward.8} parent=39 // pred_check_branch
        %272 = sbr.rel (%p270) target = $region44
      $region43: #{generator_forward.8} parent=39 // pred_region
        %s273 = smul.u32 4, %s21
        %p274 = scmp.lt.s32.totalorder %s20, 3
        %s275 = scalar_select %p274, %s20, 3
        %p276 = scmp.lt.s32.totalorder %s273, 3
        %s277 = scalar_select %p276, %s273, 3
        %s278 = smul.addr %s275, 4
        %s279 = sadd.s32 %s277, %s278
        %s280 = smul.addr %s279, 8
        %s281 = scalar_lea.vmem %s3, %s280
      $region44: #{generator_forward.8} parent=39 // pred_fallthru
        _
    $region40: #{generator_forward.8} parent=5 // pred_fallthru
      _
  $region6: #{generator_forward.8} parent=0 // loop_footer
    %s13 = sadd.s32 1, %s9
  $region7: #{generator_forward.8} parent=0 // loop_footer_branch
    %8 = sbr.rel target = $region3
  $region8: #{generator_forward.8} parent=0 // loop_exit
    _

// kernel: generator_forward.7
$region0: #{generator_forward.7}
  #allocation0 [shape = 'u32[]', space=smem, size = 0x4, offset = 0x4, fixed_abs, tag = 'smem constant byte address 0x4 - core index']
  #allocation1 [shape = 'u32[144,128]{1,0:T(1,128)}', space=vmem, size = 0x12000, scoped, tag = 'internal scratch']
  %s0 = inlined_call_operand.vmem [shape: f32[4,32,64], index: 0, kind: input, shape index: {}]
  %s1 = inlined_call_operand.vmem [shape: f32[4,64,128], index: 1, kind: input, shape index: {}]
  %s2 = inlined_call_operand.vmem [shape: f32[4,32,128], index: 2, kind: output, shape index: {0}]
  %s3 = inlined_call_operand.vmem [shape: f32[4,1,2,128], index: 3, kind: output, shape index: {1}]
  %4 = xla_tuple %s2, %s3
  %s5 = sld [smem:[#allocation0]]
  $region49: #{generator_forward.7} parent=0
    _
  %s7 = ssub.s32 1, %s5
  %s8 = scalar_select 0, %s7, %s5
  loop: start=0, step=1, limit=6
  $region2: #{generator_forward.7} parent=0 // loop_pre_header
    _
  $region3: #{generator_forward.7} parent=0 // loop_header
    %s10 = sphi 0, %s14
    %p11 = scmp.ge.s32.totalorder %s10, 6
    %s17 = sphi 0, %s29
    %s18 = sphi 0, %s25
    %s19 = sphi 0, %s17
    %s20 = sphi 0, %s18
    %s21 = sphi 0, %s19
    %s22 = sphi 0, %s20
    %s34 = sphi 0, %s36
    %s37 = sphi 0, %s34
    %s38 = sphi 0, %s37
    %s54 = sphi 0, %s38
    %s60 = sphi 0, %s62
    %s63 = sphi 0, %s60
    %s64 = sphi 0, %s63
    %s80 = sphi 0, %s64
    %s88 = sphi 0, %s90
    %s91 = sphi 0, %s88
    %s92 = sphi 0, %s91
    %s108 = sphi 0, %s92
    %s116 = sphi 0, %s118
    %s119 = sphi 0, %s116
    %s120 = sphi 0, %s119
    %s136 = sphi 0, %s120
  $region4: #{generator_forward.7} parent=0 // loop_header_branch
    %13 = sbr.rel (%p11) target = $region8
  $region5: #{generator_forward.7} parent=0 // loop_body
    %s15 = ssub.s32 %s10, 1
    %s16 = ssub.s32 %s10, 2
    %s23 = sadd.s32 1, %s18
    %p24 = scmp.ge.s32.totalorder %s23, 1
    %s25 = scalar_select %p24, 0, %s23
    %s26 = sadd.s32 1, %s17
    %s27 = scalar_select %p24, %s26, %s17
    %p28 = scmp.ge.s32.totalorder %s27, 4
    %s29 = scalar_select %p28, 0, %s27
    %s30 = ssub.s32 %s17, %s29
    %s31 = ssub.s32 %s18, %s25
    %s32 = sor.u32 %s30, %s31
    %p33 = scmp.eq.s32.totalorder %s32, 0
    %s35 = sadd.s32 %s34, 1
    %s36 = scalar_select %p33, %s34, %s35
    %p39 = pneg %p33
    %p40 = scmp.eq.s32.totalorder %s10, 3
    %p41 = por %p39, %p40
    %p42 = scmp.ne.s32.totalorder %s34, %s37
    %p43 = scmp.eq.s32.totalorder %s10, 0
    %p44 = por %p42, %p43
    %p45 = scmp.ne.s32.totalorder %s34, %s37
    %p46 = scmp.eq.s32.totalorder %s15, 3
    %p47 = por %p45, %p46
    %p48 = scmp.ne.s32.totalorder %s37, %s38
    %p49 = scmp.eq.s32.totalorder %s15, 0
    %p50 = por %p48, %p49
    %p51 = scmp.ne.s32.totalorder %s37, %s38
    %p52 = scmp.eq.s32.totalorder %s16, 3
    %p53 = por %p51, %p52
    %p55 = scmp.ne.s32.totalorder %s38, %s54
    %p56 = scmp.eq.s32.totalorder %s16, 0
    %p57 = por %p55, %p56
    %s58 = ssub.s32 %s17, %s29
    %p59 = scmp.eq.s32.totalorder %s58, 0
    %s61 = sadd.s32 %s60, 1
    %s62 = scalar_select %p59, %s60, %s61
    %p65 = pneg %p59
    %p66 = scmp.eq.s32.totalorder %s10, 3
    %p67 = por %p65, %p66
    %p68 = scmp.ne.s32.totalorder %s60, %s63
    %p69 = scmp.eq.s32.totalorder %s10, 0
    %p70 = por %p68, %p69
    %p71 = scmp.ne.s32.totalorder %s60, %s63
    %p72 = scmp.eq.s32.totalorder %s15, 3
    %p73 = por %p71, %p72
    %p74 = scmp.ne.s32.totalorder %s63, %s64
    %p75 = scmp.eq.s32.totalorder %s15, 0
    %p76 = por %p74, %p75
    %p77 = scmp.ne.s32.totalorder %s63, %s64
    %p78 = scmp.eq.s32.totalorder %s16, 3
    %p79 = por %p77, %p78
    %p81 = scmp.ne.s32.totalorder %s64, %s80
    %p82 = scmp.eq.s32.totalorder %s16, 0
    %p83 = por %p81, %p82
    %s84 = ssub.s32 %s17, %s29
    %s85 = ssub.s32 %s18, %s25
    %s86 = sor.u32 %s84, %s85
    %p87 = scmp.eq.s32.totalorder %s86, 0
    %s89 = sadd.s32 %s88, 1
    %s90 = scalar_select %p87, %s88, %s89
    %p93 = pneg %p87
    %p94 = scmp.eq.s32.totalorder %s10, 3
    %p95 = por %p93, %p94
    %p96 = scmp.ne.s32.totalorder %s88, %s91
    %p97 = scmp.eq.s32.totalorder %s10, 0
    %p98 = por %p96, %p97
    %p99 = scmp.ne.s32.totalorder %s88, %s91
    %p100 = scmp.eq.s32.totalorder %s15, 3
    %p101 = por %p99, %p100
    %p102 = scmp.ne.s32.totalorder %s91, %s92
    %p103 = scmp.eq.s32.totalorder %s15, 0
    %p104 = por %p102, %p103
    %p105 = scmp.ne.s32.totalorder %s91, %s92
    %p106 = scmp.eq.s32.totalorder %s16, 3
    %p107 = por %p105, %p106
    %p109 = scmp.ne.s32.totalorder %s92, %s108
    %p110 = scmp.eq.s32.totalorder %s16, 0
    %p111 = por %p109, %p110
    %s112 = ssub.s32 %s17, %s29
    %s113 = ssub.s32 %s18, %s25
    %s114 = sor.u32 %s112, %s113
    %p115 = scmp.eq.s32.totalorder %s114, 0
    %s117 = sadd.s32 %s116, 1
    %s118 = scalar_select %p115, %s116, %s117
    %p121 = pneg %p115
    %p122 = scmp.eq.s32.totalorder %s10, 3
    %p123 = por %p121, %p122
    %p124 = scmp.ne.s32.totalorder %s116, %s119
    %p125 = scmp.eq.s32.totalorder %s10, 0
    %p126 = por %p124, %p125
    %p127 = scmp.ne.s32.totalorder %s116, %s119
    %p128 = scmp.eq.s32.totalorder %s15, 3
    %p129 = por %p127, %p128
    %p130 = scmp.ne.s32.totalorder %s119, %s120
    %p131 = scmp.eq.s32.totalorder %s15, 0
    %p132 = por %p130, %p131
    %p133 = scmp.ne.s32.totalorder %s119, %s120
    %p134 = scmp.eq.s32.totalorder %s16, 3
    %p135 = por %p133, %p134
    %p137 = scmp.ne.s32.totalorder %s120, %s136
    %p138 = scmp.eq.s32.totalorder %s16, 0
    %p139 = por %p137, %p138
    %p140 = scmp.le.s32.totalorder 1, %s10
    %p141 = scmp.lt.s32.totalorder %s10, 5
    %p142 = pnand %p140, %p141
    %p143 = pneg %p142
    // Predicated region
    $region9: #{generator_forward.7} parent=5 // pred_check
      _
    $region10: #{generator_forward.7} parent=5 // pred_check_branch
      %145 = sbr.rel (%p142) target = $region12
    $region11: #{generator_forward.7} parent=5 // pred_region
      %s146 = ssub.s32 %s10, 1
    $region12: #{generator_forward.7} parent=5 // pred_fallthru
      _
    %p147 = scmp.lt.s32.totalorder %s10, 4
    // Predicated region
    $region13: #{generator_forward.7} parent=5 // pred_check
      %p148 = pneg %p147
    $region14: #{generator_forward.7} parent=5 // pred_check_branch
      %150 = sbr.rel (%p148) target = $region16
    $region15: #{generator_forward.7} parent=5 // pred_region
      // Predicated region
      $region17: #{generator_forward.7} parent=15 // pred_check
        %p151 = pneg %p44
      $region18: #{generator_forward.7} parent=15 // pred_check_branch
        %153 = sbr.rel (%p151) target = $region20
      $region19: #{generator_forward.7} parent=15 // pred_region
        %s154 = smul.u32 4, %s18
        %p155 = scmp.lt.s32.totalorder %s17, 3
        %s156 = scalar_select %p155, %s17, 3
        %p157 = scmp.lt.s32.totalorder %s154, 3
        %s158 = scalar_select %p157, %s154, 3
        %s159 = smul.addr %s156, 4
        %s160 = sadd.s32 %s158, %s159
        %s161 = smul.addr %s160, 8
        %s162 = scalar_lea.vmem %s0, %s161
        %s163 = smul.u32 4, %s18
      $region20: #{generator_forward.7} parent=15 // pred_fallthru
        _
      // Predicated region
      $region21: #{generator_forward.7} parent=15 // pred_check
        %p164 = pneg %p70
      $region22: #{generator_forward.7} parent=15 // pred_check_branch
        %166 = sbr.rel (%p164) target = $region24
      $region23: #{generator_forward.7} parent=15 // pred_region
        %p167 = scmp.lt.s32.totalorder %s17, 3
        %s168 = scalar_select %p167, %s17, 3
        %s169 = smul.addr %s168, 8
        %s170 = smul.addr %s169, 8
        %s171 = scalar_lea.vmem %s1, %s170
      $region24: #{generator_forward.7} parent=15 // pred_fallthru
        _
    $region16: #{generator_forward.7} parent=5 // pred_fallthru
      _
    %p172 = scmp.le.s32.totalorder 1, %s10
    %p173 = scmp.lt.s32.totalorder %s10, 5
    %p174 = pnand %p172, %p173
    %p175 = pneg %p174
    // Predicated region
    $region25: #{generator_forward.7} parent=5 // pred_check
      _
    $region26: #{generator_forward.7} parent=5 // pred_check_branch
      %177 = sbr.rel (%p174) target = $region28
    $region27: #{generator_forward.7} parent=5 // pred_region
      %s178 = ssub.s32 %s10, 1
      %s179 = smul.u32 4, %s20
      %p180 = scmp.lt.s32.totalorder %s19, 3
      %s181 = scalar_select %p180, %s19, 3
      %p182 = scmp.lt.s32.totalorder %s179, 3
      %s183 = scalar_select %p182, %s179, 3
      %s184 = smul.addr %s181, 4
      %s185 = sadd.s32 %s183, %s184
      %s186 = smul.addr %s185, 8
      %s187 = scalar_lea.vmem %s0, %s186
      %p188 = pneg %p50
      %p189 = pneg %p47
      %p190 = scmp.lt.s32.totalorder %s19, 3
      %s191 = scalar_select %p190, %s19, 3
      %s192 = smul.addr %s191, 8
      %s193 = smul.addr %s192, 8
      %s194 = scalar_lea.vmem %s1, %s193
      %p195 = pneg %p76
      %p196 = pneg %p73
      %p197 = pneg %p104
      %p198 = pneg %p101
      %s199 = smul.u32 4, %s20
      %p200 = scmp.lt.s32.totalorder %s19, 3
      %s201 = scalar_select %p200, %s19, 3
      %p202 = scmp.lt.s32.totalorder %s199, 3
      %s203 = scalar_select %p202, %s199, 3
      %s204 = smul.addr %s201, 4
      %s205 = sadd.s32 %s203, %s204
      %s206 = smul.addr %s205, 8
      %s207 = scalar_lea.vmem %s2, %s206
      %p208 = pneg %p132
      %p209 = pneg %p129
      %p210 = scmp.lt.s32.totalorder %s19, 3
      %s211 = scalar_select %p210, %s19, 3
      %p212 = scmp.lt.s32.totalorder %s20, 0
      %s213 = scalar_select %p212, %s20, 0
      %s214 = sadd.s32 %s213, %s211
      %s215 = smul.addr %s214, 2
      %s216 = scalar_lea.vmem %s3, %s215
      %s217 = smul.u32 4, %s20
      %p218 = scmp.lt.s32.totalorder %s19, 3
      %s219 = scalar_select %p218, %s19, 3
      %p220 = scmp.lt.s32.totalorder %s217, 3
      %s221 = scalar_select %p220, %s217, 3
      %s222 = smul.addr %s219, 4
      %s223 = sadd.s32 %s221, %s222
      %s224 = smul.addr %s223, 8
      %s225 = scalar_lea.vmem %s0, %s224
      %s226 = smul.u32 4, %s20
      %p227 = scmp.lt.s32.totalorder %s19, 3
      %s228 = scalar_select %p227, %s19, 3
      %s229 = smul.addr %s228, 8
      %s230 = smul.addr %s229, 8
      %s231 = scalar_lea.vmem %s1, %s230
      %s232 = smul.u32 4, %s20
      %p233 = scmp.lt.s32.totalorder %s19, 3
      %s234 = scalar_select %p233, %s19, 3
      %p235 = scmp.lt.s32.totalorder %s232, 3
      %s236 = scalar_select %p235, %s232, 3
      %s237 = smul.addr %s234, 4
      %s238 = sadd.s32 %s236, %s237
      %s239 = smul.addr %s238, 8
      %s240 = scalar_lea.vmem %s2, %s239
      %s241 = smul.u32 4, %s20
      %p242 = scmp.lt.s32.totalorder %s19, 3
      %s243 = scalar_select %p242, %s19, 3
      %p244 = scmp.lt.s32.totalorder %s20, 0
      %s245 = scalar_select %p244, %s20, 0
      %s246 = sadd.s32 %s245, %s243
      %s247 = smul.addr %s246, 2
      %s248 = scalar_lea.vmem %s3, %s247
      %v250 = vld [vmem:[%s225] sm:$0xff]
      %v251 = vld [vmem:[%s225 + $0x8] sm:$0xff]
      %v252 = vld [vmem:[%s225 + $0x10] sm:$0xff]
      %v253 = vld [vmem:[%s225 + $0x18] sm:$0xff]
      %v254 = vpack.c.bf16 %v251, %v250
      %v255 = vpack.c.bf16 %v253, %v252
      %v256 = vld [vmem:[%s231] sm:$0xff]
      %v257 = vld [vmem:[%s231 + $0x8] sm:$0xff]
      %v258 = vld [vmem:[%s231 + $0x10] sm:$0xff]
      %v259 = vld [vmem:[%s231 + $0x18] sm:$0xff]
      %v260 = vld [vmem:[%s231 + $0x20] sm:$0xff]
      %v261 = vld [vmem:[%s231 + $0x28] sm:$0xff]
      %v262 = vld [vmem:[%s231 + $0x30] sm:$0xff]
      %v263 = vld [vmem:[%s231 + $0x38] sm:$0xff]
      %v264 = vpack.c.bf16 %v257, %v256
      %v265 = vpack.c.bf16 %v259, %v258
      %v266 = vpack.c.bf16 %v261, %v260
      %v267 = vpack.c.bf16 %v263, %v262
      %vm268 = vcmask 523264
      %v270 = vsel %vm268, %v254, 0
      %v273 = vsel %vm268, %v255, 0
      %275 = vmatprep.subr.bf16.mxu0 0
      %276 = vmatpush1.bf16.msra.mxu0 0
      %277 = vmatprep.subr.bf16.mxu0 0
      %278 = vmatpush1.bf16.msra.mxu0 0
      %279 = vmatprep.subr.bf16.mxu0 0
      %280 = vmatpush1.bf16.msra.mxu0 0
      %281 = vmatprep.subr.bf16.mxu0 0
      %282 = vmatpush1.bf16.msra.mxu0 0
      %283 = vmatprep.subr.bf16.mxu0 0
      %284 = vmatpush1.bf16.msra.mxu0 %v267
      %285 = vmatprep.subr.bf16.mxu0 0
      %286 = vmatpush1.bf16.msra.mxu0 %v266
      %287 = vmatprep.subr.bf16.mxu0 0
      %288 = vmatpush1.bf16.msra.mxu0 %v265
      %289 = vmatprep.subr.bf16.mxu0 0
      %290 = vmatpush1.bf16.msra.mxu0 %v264
      %291 = vmatprep.subr.bf16.mxu0 0
      %292 = vmatpush2.bf16.msra.mxu0 0
      %293 = vmatprep.subr.bf16.mxu0 0
      %294 = vmatpush2.bf16.msra.mxu0 0
      %295 = vmatprep.subr.bf16.mxu0 0
      %296 = vmatpush2.bf16.msra.mxu0 0
      %297 = vmatprep.subr.bf16.mxu0 0
      %298 = vmatpush2.bf16.msra.mxu0 0
      %299 = vmatprep.subr.bf16.mxu0 0
      %300 = vmatpush2.bf16.msra.mxu0 0
      %301 = vmatprep.subr.bf16.mxu0 0
      %302 = vmatpush2.bf16.msra.mxu0 0
      %303 = vmatprep.subr.bf16.mxu0 0
      %304 = vmatpush2.bf16.msra.mxu0 0
      %305 = vmatprep.subr.bf16.mxu0 0
      %306 = vmatpush2.bf16.msra.mxu0 0
      %307 = vmatprep.mubr.bf16.mxu0 0
      %308 = vmatmul.mubr.bf16.gmra.mxu0 %v270
      %v309 = vpop.f32.mrf.mxu0
      %v310 = vadd.f32 0.0, %v309
      %v311 = vpop.f32.mrf.mxu0
      %v312 = vpop.f32.mrf.mxu0
      %v313 = vadd.f32 0.0, %v312
      %v314 = vpop.f32.mrf.mxu0
      %315 = vmatprep.mubr.bf16.mxu0 0
      %316 = vmatmul.mubr.bf16.gmra.mxu0 %v273
      %v317 = vpop.f32.mrf.mxu0
      %v318 = vadd.f32 0.0, %v317
      %v319 = vpop.f32.mrf.mxu0
      %v320 = vpop.f32.mrf.mxu0
      %v321 = vadd.f32 0.0, %v320
      %v322 = vpop.f32.mrf.mxu0
      %323 = vdwg.mxu0
      %324 = vst [vmem:[%s240] sm:$0xff] %v310
      %325 = vst [vmem:[%s240 + $0x8] sm:$0xff] %v313
      %326 = vst [vmem:[%s240 + $0x10] sm:$0xff] %v318
      %327 = vst [vmem:[%s240 + $0x18] sm:$0xff] %v321
      %v328 = vadd.f32 %v310, %v313
      %v329 = vadd.f32 %v328, %v318
      %v330 = vadd.f32 %v329, %v321
      %v331 = vrot.slane %v330, 4
      %v332 = vadd.f32 %v330, %v331
      %v333 = vrot.slane %v332, 2
      %v334 = vadd.f32 %v332, %v333
      %v335 = vrot.slane %v334, 1
      %v336 = vadd.f32 %v334, %v335
      %v337 = vmul.f32 %v310, %v310
      %v338 = vmul.f32 %v313, %v313
      %v339 = vmul.f32 %v318, %v318
      %v340 = vmul.f32 %v321, %v321
      %v341 = vadd.f32 %v337, %v338
      %v342 = vadd.f32 %v341, %v339
      %v343 = vadd.f32 %v342, %v340
      %v344 = vrot.slane %v343, 4
      %v345 = vadd.f32 %v343, %v344
      %v346 = vrot.slane %v345, 2
      %v347 = vadd.f32 %v345, %v346
      %v348 = vrot.slane %v347, 1
      %v349 = vadd.f32 %v347, %v348
      %vm350 = vcmask 1040384
      %v351 = vsel %vm350, %v336, %v349
      %352 = vst [vmem:[%s248] sm:$0x3] %v351
      %s353 = smul.u32 4, %s20
      %p354 = scmp.lt.s32.totalorder %s19, 3
      %s355 = scalar_select %p354, %s19, 3
      %p356 = scmp.lt.s32.totalorder %s353, 3
      %s357 = scalar_select %p356, %s353, 3
      %s358 = smul.addr %s355, 4
      %s359 = sadd.s32 %s357, %s358
      %s360 = smul.addr %s359, 8
      %s361 = scalar_lea.vmem %s2, %s360
      %p362 = scmp.lt.s32.totalorder %s19, 3
      %s363 = scalar_select %p362, %s19, 3
      %p364 = scmp.lt.s32.totalorder %s20, 0
      %s365 = scalar_select %p364, %s20, 0
      %s366 = sadd.s32 %s365, %s363
      %s367 = smul.addr %s366, 2
      %s368 = scalar_lea.vmem %s3, %s367
      // Predicated region
      $region29: #{generator_forward.7} parent=27 // pred_check
        %p369 = pneg %p101
      $region30: #{generator_forward.7} parent=27 // pred_check_branch
        %371 = sbr.rel (%p369) target = $region32
      $region31: #{generator_forward.7} parent=27 // pred_region
        %s372 = smul.u32 4, %s20
      $region32: #{generator_forward.7} parent=27 // pred_fallthru
        _
      // Predicated region
      $region33: #{generator_forward.7} parent=27 // pred_check
        %p373 = pneg %p129
      $region34: #{generator_forward.7} parent=27 // pred_check_branch
        %375 = sbr.rel (%p373) target = $region36
      $region35: #{generator_forward.7} parent=27 // pred_region
        _
      $region36: #{generator_forward.7} parent=27 // pred_fallthru
        _
    $region28: #{generator_forward.7} parent=5 // pred_fallthru
      _
    %p376 = scmp.le.s32.totalorder 2, %s10
    // Predicated region
    $region37: #{generator_forward.7} parent=5 // pred_check
      %p377 = pneg %p376
    $region38: #{generator_forward.7} parent=5 // pred_check_branch
      %379 = sbr.rel (%p377) target = $region40
    $region39: #{generator_forward.7} parent=5 // pred_region
      %s380 = ssub.s32 %s10, 2
      // Predicated region
      $region41: #{generator_forward.7} parent=39 // pred_check
        %p381 = pneg %p107
      $region42: #{generator_forward.7} parent=39 // pred_check_branch
        %383 = sbr.rel (%p381) target = $region44
      $region43: #{generator_forward.7} parent=39 // pred_region
        %s384 = smul.u32 4, %s22
        %p385 = scmp.lt.s32.totalorder %s21, 3
        %s386 = scalar_select %p385, %s21, 3
        %p387 = scmp.lt.s32.totalorder %s384, 3
        %s388 = scalar_select %p387, %s384, 3
        %s389 = smul.addr %s386, 4
        %s390 = sadd.s32 %s388, %s389
        %s391 = smul.addr %s390, 8
        %s392 = scalar_lea.vmem %s2, %s391
      $region44: #{generator_forward.7} parent=39 // pred_fallthru
        _
      // Predicated region
      $region45: #{generator_forward.7} parent=39 // pred_check
        %p393 = pneg %p135
      $region46: #{generator_forward.7} parent=39 // pred_check_branch
        %395 = sbr.rel (%p393) target = $region48
      $region47: #{generator_forward.7} parent=39 // pred_region
        %p396 = scmp.lt.s32.totalorder %s21, 3
        %s397 = scalar_select %p396, %s21, 3
        %p398 = scmp.lt.s32.totalorder %s22, 0
        %s399 = scalar_select %p398, %s22, 0
        %s400 = sadd.s32 %s399, %s397
        %s401 = smul.addr %s400, 2
        %s402 = scalar_lea.vmem %s3, %s401
      $region48: #{generator_forward.7} parent=39 // pred_fallthru
        _
    $region40: #{generator_forward.7} parent=5 // pred_fallthru
      _
  $region6: #{generator_forward.7} parent=0 // loop_footer
    %s14 = sadd.s32 1, %s10
  $region7: #{generator_forward.7} parent=0 // loop_footer_branch
    %9 = sbr.rel target = $region3
  $region8: #{generator_forward.7} parent=0 // loop_exit
    _

// kernel: generator_forward.9
$region0: #{generator_forward.9}
  #allocation0 [shape = 'u32[]', space=smem, size = 0x4, offset = 0x4, fixed_abs, tag = 'smem constant byte address 0x4 - core index']
  #allocation1 [shape = 'u32[144,128]{1,0:T(1,128)}', space=vmem, size = 0x12000, scoped, tag = 'internal scratch']
  %s0 = inlined_call_operand.vmem [shape: f32[4,128,32], index: 0, kind: input, shape index: {}]
  %s1 = inlined_call_operand.vmem [shape: f32[4,32,128], index: 1, kind: input, shape index: {}]
  %s2 = inlined_call_operand.vmem [shape: f32[4,128,128], index: 2, kind: output, shape index: {}]
  %s3 = sld [smem:[#allocation0]]
  $region41: #{generator_forward.9} parent=0
    _
  %s5 = ssub.s32 1, %s3
  %s6 = scalar_select 0, %s5, %s3
  loop: start=0, step=1, limit=6
  $region2: #{generator_forward.9} parent=0 // loop_pre_header
    _
  $region3: #{generator_forward.9} parent=0 // loop_header
    %s8 = sphi 0, %s12
    %p9 = scmp.ge.s32.totalorder %s8, 6
    %s15 = sphi 0, %s27
    %s16 = sphi 0, %s23
    %s17 = sphi 0, %s15
    %s18 = sphi 0, %s16
    %s19 = sphi 0, %s17
    %s20 = sphi 0, %s18
    %s32 = sphi 0, %s34
    %s35 = sphi 0, %s32
    %s36 = sphi 0, %s35
    %s52 = sphi 0, %s36
    %s58 = sphi 0, %s60
    %s61 = sphi 0, %s58
    %s62 = sphi 0, %s61
    %s78 = sphi 0, %s62
    %s86 = sphi 0, %s88
    %s89 = sphi 0, %s86
    %s90 = sphi 0, %s89
    %s106 = sphi 0, %s90
  $region4: #{generator_forward.9} parent=0 // loop_header_branch
    %11 = sbr.rel (%p9) target = $region8
  $region5: #{generator_forward.9} parent=0 // loop_body
    %s13 = ssub.s32 %s8, 1
    %s14 = ssub.s32 %s8, 2
    %s21 = sadd.s32 1, %s16
    %p22 = scmp.ge.s32.totalorder %s21, 1
    %s23 = scalar_select %p22, 0, %s21
    %s24 = sadd.s32 1, %s15
    %s25 = scalar_select %p22, %s24, %s15
    %p26 = scmp.ge.s32.totalorder %s25, 4
    %s27 = scalar_select %p26, 0, %s25
    %s28 = ssub.s32 %s15, %s27
    %s29 = ssub.s32 %s16, %s23
    %s30 = sor.u32 %s28, %s29
    %p31 = scmp.eq.s32.totalorder %s30, 0
    %s33 = sadd.s32 %s32, 1
    %s34 = scalar_select %p31, %s32, %s33
    %p37 = pneg %p31
    %p38 = scmp.eq.s32.totalorder %s8, 3
    %p39 = por %p37, %p38
    %p40 = scmp.ne.s32.totalorder %s32, %s35
    %p41 = scmp.eq.s32.totalorder %s8, 0
    %p42 = por %p40, %p41
    %p43 = scmp.ne.s32.totalorder %s32, %s35
    %p44 = scmp.eq.s32.totalorder %s13, 3
    %p45 = por %p43, %p44
    %p46 = scmp.ne.s32.totalorder %s35, %s36
    %p47 = scmp.eq.s32.totalorder %s13, 0
    %p48 = por %p46, %p47
    %p49 = scmp.ne.s32.totalorder %s35, %s36
    %p50 = scmp.eq.s32.totalorder %s14, 3
    %p51 = por %p49, %p50
    %p53 = scmp.ne.s32.totalorder %s36, %s52
    %p54 = scmp.eq.s32.totalorder %s14, 0
    %p55 = por %p53, %p54
    %s56 = ssub.s32 %s15, %s27
    %p57 = scmp.eq.s32.totalorder %s56, 0
    %s59 = sadd.s32 %s58, 1
    %s60 = scalar_select %p57, %s58, %s59
    %p63 = pneg %p57
    %p64 = scmp.eq.s32.totalorder %s8, 3
    %p65 = por %p63, %p64
    %p66 = scmp.ne.s32.totalorder %s58, %s61
    %p67 = scmp.eq.s32.totalorder %s8, 0
    %p68 = por %p66, %p67
    %p69 = scmp.ne.s32.totalorder %s58, %s61
    %p70 = scmp.eq.s32.totalorder %s13, 3
    %p71 = por %p69, %p70
    %p72 = scmp.ne.s32.totalorder %s61, %s62
    %p73 = scmp.eq.s32.totalorder %s13, 0
    %p74 = por %p72, %p73
    %p75 = scmp.ne.s32.totalorder %s61, %s62
    %p76 = scmp.eq.s32.totalorder %s14, 3
    %p77 = por %p75, %p76
    %p79 = scmp.ne.s32.totalorder %s62, %s78
    %p80 = scmp.eq.s32.totalorder %s14, 0
    %p81 = por %p79, %p80
    %s82 = ssub.s32 %s15, %s27
    %s83 = ssub.s32 %s16, %s23
    %s84 = sor.u32 %s82, %s83
    %p85 = scmp.eq.s32.totalorder %s84, 0
    %s87 = sadd.s32 %s86, 1
    %s88 = scalar_select %p85, %s86, %s87
    %p91 = pneg %p85
    %p92 = scmp.eq.s32.totalorder %s8, 3
    %p93 = por %p91, %p92
    %p94 = scmp.ne.s32.totalorder %s86, %s89
    %p95 = scmp.eq.s32.totalorder %s8, 0
    %p96 = por %p94, %p95
    %p97 = scmp.ne.s32.totalorder %s86, %s89
    %p98 = scmp.eq.s32.totalorder %s13, 3
    %p99 = por %p97, %p98
    %p100 = scmp.ne.s32.totalorder %s89, %s90
    %p101 = scmp.eq.s32.totalorder %s13, 0
    %p102 = por %p100, %p101
    %p103 = scmp.ne.s32.totalorder %s89, %s90
    %p104 = scmp.eq.s32.totalorder %s14, 3
    %p105 = por %p103, %p104
    %p107 = scmp.ne.s32.totalorder %s90, %s106
    %p108 = scmp.eq.s32.totalorder %s14, 0
    %p109 = por %p107, %p108
    %p110 = scmp.le.s32.totalorder 1, %s8
    %p111 = scmp.lt.s32.totalorder %s8, 5
    %p112 = pnand %p110, %p111
    %p113 = pneg %p112
    // Predicated region
    $region9: #{generator_forward.9} parent=5 // pred_check
      _
    $region10: #{generator_forward.9} parent=5 // pred_check_branch
      %115 = sbr.rel (%p112) target = $region12
    $region11: #{generator_forward.9} parent=5 // pred_region
      %s116 = ssub.s32 %s8, 1
    $region12: #{generator_forward.9} parent=5 // pred_fallthru
      _
    %p117 = scmp.lt.s32.totalorder %s8, 4
    // Predicated region
    $region13: #{generator_forward.9} parent=5 // pred_check
      %p118 = pneg %p117
    $region14: #{generator_forward.9} parent=5 // pred_check_branch
      %120 = sbr.rel (%p118) target = $region16
    $region15: #{generator_forward.9} parent=5 // pred_region
      // Predicated region
      $region17: #{generator_forward.9} parent=15 // pred_check
        %p121 = pneg %p42
      $region18: #{generator_forward.9} parent=15 // pred_check_branch
        %123 = sbr.rel (%p121) target = $region20
      $region19: #{generator_forward.9} parent=15 // pred_region
        %s124 = smul.u32 16, %s16
        %p125 = scmp.lt.s32.totalorder %s15, 3
        %s126 = scalar_select %p125, %s15, 3
        %p127 = scmp.lt.s32.totalorder %s124, 15
        %s128 = scalar_select %p127, %s124, 15
        %s129 = smul.addr %s126, 16
        %s130 = sadd.s32 %s128, %s129
        %s131 = smul.addr %s130, 8
        %s132 = scalar_lea.vmem %s0, %s131
        %s133 = smul.u32 16, %s16
      $region20: #{generator_forward.9} parent=15 // pred_fallthru
        _
      // Predicated region
      $region21: #{generator_forward.9} parent=15 // pred_check
        %p134 = pneg %p68
      $region22: #{generator_forward.9} parent=15 // pred_check_branch
        %136 = sbr.rel (%p134) target = $region24
      $region23: #{generator_forward.9} parent=15 // pred_region
        %p137 = scmp.lt.s32.totalorder %s15, 3
        %s138 = scalar_select %p137, %s15, 3
        %s139 = smul.addr %s138, 4
        %s140 = smul.addr %s139, 8
        %s141 = scalar_lea.vmem %s1, %s140
      $region24: #{generator_forward.9} parent=15 // pred_fallthru
        _
    $region16: #{generator_forward.9} parent=5 // pred_fallthru
      _
    %p142 = scmp.le.s32.totalorder 1, %s8
    %p143 = scmp.lt.s32.totalorder %s8, 5
    %p144 = pnand %p142, %p143
    %p145 = pneg %p144
    // Predicated region
    $region25: #{generator_forward.9} parent=5 // pred_check
      _
    $region26: #{generator_forward.9} parent=5 // pred_check_branch
      %147 = sbr.rel (%p144) target = $region28
    $region27: #{generator_forward.9} parent=5 // pred_region
      %s148 = ssub.s32 %s8, 1
      %s149 = smul.u32 16, %s18
      %p150 = scmp.lt.s32.totalorder %s17, 3
      %s151 = scalar_select %p150, %s17, 3
      %p152 = scmp.lt.s32.totalorder %s149, 15
      %s153 = scalar_select %p152, %s149, 15
      %s154 = smul.addr %s151, 16
      %s155 = sadd.s32 %s153, %s154
      %s156 = smul.addr %s155, 8
      %s157 = scalar_lea.vmem %s0, %s156
      %p158 = pneg %p48
      %p159 = pneg %p45
      %p160 = scmp.lt.s32.totalorder %s17, 3
      %s161 = scalar_select %p160, %s17, 3
      %s162 = smul.addr %s161, 4
      %s163 = smul.addr %s162, 8
      %s164 = scalar_lea.vmem %s1, %s163
      %p165 = pneg %p74
      %p166 = pneg %p71
      %p167 = pneg %p102
      %p168 = pneg %p99
      %s169 = smul.u32 16, %s18
      %p170 = scmp.lt.s32.totalorder %s17, 3
      %s171 = scalar_select %p170, %s17, 3
      %p172 = scmp.lt.s32.totalorder %s169, 15
      %s173 = scalar_select %p172, %s169, 15
      %s174 = smul.addr %s171, 16
      %s175 = sadd.s32 %s173, %s174
      %s176 = smul.addr %s175, 8
      %s177 = scalar_lea.vmem %s2, %s176
      %s178 = smul.u32 16, %s18
      %p179 = scmp.lt.s32.totalorder %s17, 3
      %s180 = scalar_select %p179, %s17, 3
      %p181 = scmp.lt.s32.totalorder %s178, 15
      %s182 = scalar_select %p181, %s178, 15
      %s183 = smul.addr %s180, 16
      %s184 = sadd.s32 %s182, %s183
      %s185 = smul.addr %s184, 8
      %s186 = scalar_lea.vmem %s0, %s185
      %s187 = smul.u32 16, %s18
      %p188 = scmp.lt.s32.totalorder %s17, 3
      %s189 = scalar_select %p188, %s17, 3
      %s190 = smul.addr %s189, 4
      %s191 = smul.addr %s190, 8
      %s192 = scalar_lea.vmem %s1, %s191
      %s193 = smul.u32 16, %s18
      %p194 = scmp.lt.s32.totalorder %s17, 3
      %s195 = scalar_select %p194, %s17, 3
      %p196 = scmp.lt.s32.totalorder %s193, 15
      %s197 = scalar_select %p196, %s193, 15
      %s198 = smul.addr %s195, 16
      %s199 = sadd.s32 %s197, %s198
      %s200 = smul.addr %s199, 8
      %s201 = scalar_lea.vmem %s2, %s200
      %s202 = smul.u32 16, %s18
      %v204 = vld [vmem:[%s186] sm:$0xff]
      %v205 = vld [vmem:[%s186 + $0x8] sm:$0xff]
      %v206 = vld [vmem:[%s186 + $0x10] sm:$0xff]
      %v207 = vld [vmem:[%s186 + $0x18] sm:$0xff]
      %v208 = vld [vmem:[%s186 + $0x20] sm:$0xff]
      %v209 = vld [vmem:[%s186 + $0x28] sm:$0xff]
      %v210 = vld [vmem:[%s186 + $0x30] sm:$0xff]
      %v211 = vld [vmem:[%s186 + $0x38] sm:$0xff]
      %v212 = vld [vmem:[%s186 + $0x40] sm:$0xff]
      %v213 = vld [vmem:[%s186 + $0x48] sm:$0xff]
      %v214 = vld [vmem:[%s186 + $0x50] sm:$0xff]
      %v215 = vld [vmem:[%s186 + $0x58] sm:$0xff]
      %v216 = vld [vmem:[%s186 + $0x60] sm:$0xff]
      %v217 = vld [vmem:[%s186 + $0x68] sm:$0xff]
      %v218 = vld [vmem:[%s186 + $0x70] sm:$0xff]
      %v219 = vld [vmem:[%s186 + $0x78] sm:$0xff]
      %v220 = vpack.c.bf16 %v205, %v204
      %v221 = vpack.c.bf16 %v207, %v206
      %v222 = vpack.c.bf16 %v209, %v208
      %v223 = vpack.c.bf16 %v211, %v210
      %v224 = vpack.c.bf16 %v213, %v212
      %v225 = vpack.c.bf16 %v215, %v214
      %v226 = vpack.c.bf16 %v217, %v216
      %v227 = vpack.c.bf16 %v219, %v218
      %v228 = vld [vmem:[%s192] sm:$0xff]
      %v229 = vld [vmem:[%s192 + $0x8] sm:$0xff]
      %v230 = vld [vmem:[%s192 + $0x10] sm:$0xff]
      %v231 = vld [vmem:[%s192 + $0x18] sm:$0xff]
      %v232 = vpack.c.bf16 %v229, %v228
      %v233 = vpack.c.bf16 %v231, %v230
      %vm234 = vcmask 261120
      %v236 = vsel %vm234, %v220, 0
      %v239 = vsel %vm234, %v221, 0
      %v242 = vsel %vm234, %v222, 0
      %v245 = vsel %vm234, %v223, 0
      %v248 = vsel %vm234, %v224, 0
      %v251 = vsel %vm234, %v225, 0
      %v254 = vsel %vm234, %v226, 0
      %v257 = vsel %vm234, %v227, 0
      %259 = vmatprep.subr.bf16.mxu0 0
      %260 = vmatpush1.bf16.msra.mxu0 0
      %261 = vmatprep.subr.bf16.mxu0 0
      %262 = vmatpush1.bf16.msra.mxu0 0
      %263 = vmatprep.subr.bf16.mxu0 0
      %264 = vmatpush1.bf16.msra.mxu0 0
      %265 = vmatprep.subr.bf16.mxu0 0
      %266 = vmatpush1.bf16.msra.mxu0 0
      %267 = vmatprep.subr.bf16.mxu0 0
      %268 = vmatpush1.bf16.msra.mxu0 0
      %269 = vmatprep.subr.bf16.mxu0 0
      %270 = vmatpush1.bf16.msra.mxu0 0
      %271 = vmatprep.subr.bf16.mxu0 0
      %272 = vmatpush1.bf16.msra.mxu0 %v233
      %273 = vmatprep.subr.bf16.mxu0 0
      %274 = vmatpush1.bf16.msra.mxu0 %v232
      %275 = vmatprep.subr.bf16.mxu0 0
      %276 = vmatpush2.bf16.msra.mxu0 0
      %277 = vmatprep.subr.bf16.mxu0 0
      %278 = vmatpush2.bf16.msra.mxu0 0
      %279 = vmatprep.subr.bf16.mxu0 0
      %280 = vmatpush2.bf16.msra.mxu0 0
      %281 = vmatprep.subr.bf16.mxu0 0
      %282 = vmatpush2.bf16.msra.mxu0 0
      %283 = vmatprep.subr.bf16.mxu0 0
      %284 = vmatpush2.bf16.msra.mxu0 0
      %285 = vmatprep.subr.bf16.mxu0 0
      %286 = vmatpush2.bf16.msra.mxu0 0
      %287 = vmatprep.subr.bf16.mxu0 0
      %288 = vmatpush2.bf16.msra.mxu0 0
      %289 = vmatprep.subr.bf16.mxu0 0
      %290 = vmatpush2.bf16.msra.mxu0 0
      %291 = vmatprep.mubr.bf16.mxu0 0
      %292 = vmatmul.mubr.bf16.gmra.mxu0 %v236
      %v293 = vpop.f32.mrf.mxu0
      %v294 = vadd.f32 0.0, %v293
      %v295 = vpop.f32.mrf.mxu0
      %v296 = vpop.f32.mrf.mxu0
      %v297 = vadd.f32 0.0, %v296
      %v298 = vpop.f32.mrf.mxu0
      %299 = vmatprep.mubr.bf16.mxu0 0
      %300 = vmatmul.mubr.bf16.gmra.mxu0 %v239
      %v301 = vpop.f32.mrf.mxu0
      %v302 = vadd.f32 0.0, %v301
      %v303 = vpop.f32.mrf.mxu0
      %v304 = vpop.f32.mrf.mxu0
      %v305 = vadd.f32 0.0, %v304
      %v306 = vpop.f32.mrf.mxu0
      %307 = vmatprep.mubr.bf16.mxu0 0
      %308 = vmatmul.mubr.bf16.gmra.mxu0 %v242
      %v309 = vpop.f32.mrf.mxu0
      %v310 = vadd.f32 0.0, %v309
      %v311 = vpop.f32.mrf.mxu0
      %v312 = vpop.f32.mrf.mxu0
      %v313 = vadd.f32 0.0, %v312
      %v314 = vpop.f32.mrf.mxu0
      %315 = vmatprep.mubr.bf16.mxu0 0
      %316 = vmatmul.mubr.bf16.gmra.mxu0 %v245
      %v317 = vpop.f32.mrf.mxu0
      %v318 = vadd.f32 0.0, %v317
      %v319 = vpop.f32.mrf.mxu0
      %v320 = vpop.f32.mrf.mxu0
      %v321 = vadd.f32 0.0, %v320
      %v322 = vpop.f32.mrf.mxu0
      %323 = vmatprep.mubr.bf16.mxu0 0
      %324 = vmatmul.mubr.bf16.gmra.mxu0 %v248
      %v325 = vpop.f32.mrf.mxu0
      %v326 = vadd.f32 0.0, %v325
      %v327 = vpop.f32.mrf.mxu0
      %v328 = vpop.f32.mrf.mxu0
      %v329 = vadd.f32 0.0, %v328
      %v330 = vpop.f32.mrf.mxu0
      %331 = vmatprep.mubr.bf16.mxu0 0
      %332 = vmatmul.mubr.bf16.gmra.mxu0 %v251
      %v333 = vpop.f32.mrf.mxu0
      %v334 = vadd.f32 0.0, %v333
      %v335 = vpop.f32.mrf.mxu0
      %v336 = vpop.f32.mrf.mxu0
      %v337 = vadd.f32 0.0, %v336
      %v338 = vpop.f32.mrf.mxu0
      %339 = vmatprep.mubr.bf16.mxu0 0
      %340 = vmatmul.mubr.bf16.gmra.mxu0 %v254
      %v341 = vpop.f32.mrf.mxu0
      %v342 = vadd.f32 0.0, %v341
      %v343 = vpop.f32.mrf.mxu0
      %v344 = vpop.f32.mrf.mxu0
      %v345 = vadd.f32 0.0, %v344
      %v346 = vpop.f32.mrf.mxu0
      %347 = vmatprep.mubr.bf16.mxu0 0
      %348 = vmatmul.mubr.bf16.gmra.mxu0 %v257
      %v349 = vpop.f32.mrf.mxu0
      %v350 = vadd.f32 0.0, %v349
      %v351 = vpop.f32.mrf.mxu0
      %v352 = vpop.f32.mrf.mxu0
      %v353 = vadd.f32 0.0, %v352
      %v354 = vpop.f32.mrf.mxu0
      %355 = vdwg.mxu0
      %v356 = vtanh.pop %v294
      %v357 = vtanh.pop %v297
      %v358 = vtanh.pop %v302
      %v359 = vtanh.pop %v305
      %v360 = vtanh.pop %v310
      %v361 = vtanh.pop %v313
      %v362 = vtanh.pop %v318
      %v363 = vtanh.pop %v321
      %v364 = vtanh.pop %v326
      %v365 = vtanh.pop %v329
      %v366 = vtanh.pop %v334
      %v367 = vtanh.pop %v337
      %v368 = vtanh.pop %v342
      %v369 = vtanh.pop %v345
      %v370 = vtanh.pop %v350
      %v371 = vtanh.pop %v353
      %372 = vst [vmem:[%s201] sm:$0xff] %v356
      %373 = vst [vmem:[%s201 + $0x8] sm:$0xff] %v357
      %374 = vst [vmem:[%s201 + $0x10] sm:$0xff] %v358
      %375 = vst [vmem:[%s201 + $0x18] sm:$0xff] %v359
      %376 = vst [vmem:[%s201 + $0x20] sm:$0xff] %v360
      %377 = vst [vmem:[%s201 + $0x28] sm:$0xff] %v361
      %378 = vst [vmem:[%s201 + $0x30] sm:$0xff] %v362
      %379 = vst [vmem:[%s201 + $0x38] sm:$0xff] %v363
      %380 = vst [vmem:[%s201 + $0x40] sm:$0xff] %v364
      %381 = vst [vmem:[%s201 + $0x48] sm:$0xff] %v365
      %382 = vst [vmem:[%s201 + $0x50] sm:$0xff] %v366
      %383 = vst [vmem:[%s201 + $0x58] sm:$0xff] %v367
      %384 = vst [vmem:[%s201 + $0x60] sm:$0xff] %v368
      %385 = vst [vmem:[%s201 + $0x68] sm:$0xff] %v369
      %386 = vst [vmem:[%s201 + $0x70] sm:$0xff] %v370
      %387 = vst [vmem:[%s201 + $0x78] sm:$0xff] %v371
      %s388 = smul.u32 16, %s18
      %p389 = scmp.lt.s32.totalorder %s17, 3
      %s390 = scalar_select %p389, %s17, 3
      %p391 = scmp.lt.s32.totalorder %s388, 15
      %s392 = scalar_select %p391, %s388, 15
      %s393 = smul.addr %s390, 16
      %s394 = sadd.s32 %s392, %s393
      %s395 = smul.addr %s394, 8
      %s396 = scalar_lea.vmem %s2, %s395
      // Predicated region
      $region29: #{generator_forward.9} parent=27 // pred_check
        %p397 = pneg %p99
      $region30: #{generator_forward.9} parent=27 // pred_check_branch
        %399 = sbr.rel (%p397) target = $region32
      $region31: #{generator_forward.9} parent=27 // pred_region
        %s400 = smul.u32 16, %s18
      $region32: #{generator_forward.9} parent=27 // pred_fallthru
        _
    $region28: #{generator_forward.9} parent=5 // pred_fallthru
      _
    %p401 = scmp.le.s32.totalorder 2, %s8
    // Predicated region
    $region33: #{generator_forward.9} parent=5 // pred_check
      %p402 = pneg %p401
    $region34: #{generator_forward.9} parent=5 // pred_check_branch
      %404 = sbr.rel (%p402) target = $region36
    $region35: #{generator_forward.9} parent=5 // pred_region
      %s405 = ssub.s32 %s8, 2
      // Predicated region
      $region37: #{generator_forward.9} parent=35 // pred_check
        %p406 = pneg %p105
      $region38: #{generator_forward.9} parent=35 // pred_check_branch
        %408 = sbr.rel (%p406) target = $region40
      $region39: #{generator_forward.9} parent=35 // pred_region
        %s409 = smul.u32 16, %s20
        %p410 = scmp.lt.s32.totalorder %s19, 3
        %s411 = scalar_select %p410, %s19, 3
        %p412 = scmp.lt.s32.totalorder %s409, 15
        %s413 = scalar_select %p412, %s409, 15
        %s414 = smul.addr %s411, 16
        %s415 = sadd.s32 %s413, %s414
        %s416 = smul.addr %s415, 8
        %s417 = scalar_lea.vmem %s2, %s416
      $region40: #{generator_forward.9} parent=35 // pred_fallthru
        _
    $region36: #{generator_forward.9} parent=5 // pred_fallthru
      _
  $region6: #{generator_forward.9} parent=0 // loop_footer
    %s12 = sadd.s32 1, %s8
  $region7: #{generator_forward.9} parent=0 // loop_footer_branch
    %7 = sbr.rel target = $region3
  $region8: #{generator_forward.9} parent=0 // loop_exit
    _

</llo_original>
